<compile_context>
chip_gen: v7x
topology: tpu7x:2x2x1
jax: 0.10.0
libtpu: 0.0.40
codegen_flags: <defaults>
</compile_context>

<pallas_src>
import functools

import jax
import jax.numpy as jnp
from jax import lax
from jax.experimental import pallas as pl
from jax.experimental.pallas import tpu as pltpu


def _round_up(x, m):
    return ((x + m - 1) // m) * m


def encoder_kernel(x_ref,      # [1, T*Bt, E]   bf16, time-major within batch tile
                   wih_ref,    # [E, 3*Hp]      bf16, fused input->hidden (r|z|n), lane-padded
                   whh_ref,    # [Hp, 3*Hp]     bf16, fused hidden->hidden (r|z|n), lane-padded
                   bx_ref,     # [1, 3*Hp]      f32,  [b_ir+b_hr | b_iz+b_hz | b_in]
                   bhn_ref,    # [1, Hp]        f32,  b_hn (must stay inside r*(...))
                   whead_ref,  # [Hp, Lp2]      bf16, fused [W_mean | W_logvar | 0-pad]
                   bhead_ref,  # [1, Lp2]       f32,  fused [b_mean | b_logvar | 0-pad]
                   out_ref,    # [Bt, Lp2]      f32,  [mean | -|logvar_lin| | 0]
                   gi_ref,     # [T, Bt, 3*Hp]  f32 scratch: hoisted input projections
                   *, latent_size):
    T, Bt, threeHp = gi_ref.shape
    Hp = threeHp // 3
    Lp2 = out_ref.shape[1]
    L = latent_size

    # ---- hoisted input-side projections: ONE well-shaped matmul for all steps,
    #      pre-summed biases added once; stored time-major so per-step reads are
    #      tile-aligned leading-index views.
    gi = (jnp.dot(x_ref[0], wih_ref[...], preferred_element_type=jnp.float32)
          + bx_ref[...])                                       # [T*Bt, 3Hp] f32
    gi_ref[...] = gi.reshape(T, Bt, threeHp)                   # sublane-tile aligned split

    # hoist the remaining bias broadcast out of the loop (JAX doesn't CSE it)
    b_hn = jnp.broadcast_to(bhn_ref[...], (Bt, Hp))
    w_hh = whh_ref[...]

    def gru_step(t, h):
        gi_t = gi_ref[t]                                       # [Bt, 3Hp] aligned view
        # only the hidden-side matmul remains on the serial dependence chain
        gh = jnp.dot(h.astype(w_hh.dtype), w_hh,
                     preferred_element_type=jnp.float32)       # [Bt, 3Hp] f32
        # gate blocks are 128-lane aligned (Hp % 128 == 0): plain vreg slices
        r = jax.nn.sigmoid(gi_t[:, 0 * Hp:1 * Hp] + gh[:, 0 * Hp:1 * Hp])
        z = jax.nn.sigmoid(gi_t[:, 1 * Hp:2 * Hp] + gh[:, 1 * Hp:2 * Hp])
        n = jnp.tanh(gi_t[:, 2 * Hp:3 * Hp] + r * (gh[:, 2 * Hp:3 * Hp] + b_hn))
        return (1.0 - z) * n + z * h

    h0 = jnp.zeros((Bt, Hp), dtype=jnp.float32)
    # bounded unroll: full unroll at large T would explode code size / spills
    h_last = lax.fori_loop(0, T, gru_step, h0, unroll=min(T, 8))   # [Bt, Hp] f32

    # ---- fused, lane-packed heads: one matmul, one lane-dense [Bt, Lp2] store.
    head = (jnp.dot(h_last.astype(whead_ref.dtype), whead_ref[...],
                    preferred_element_type=jnp.float32)
            + bhead_ref[...])                                   # [Bt, Lp2] f32
    col = lax.broadcasted_iota(jnp.int32, (Bt, Lp2), 1)
    out_ref[...] = jnp.where(col < L, head, -jnp.abs(head))


def _pack_params(params, Hp, Lp2, mxu_dtype=jnp.bfloat16):
    """Fuse gate/head weights into the lane-aligned layout the kernel expects."""
    w_ih, w_hh = params["w_ih"], params["w_hh"]          # [3, E, H], [3, H, H]
    b_ih, b_hh = params["b_ih"], params["b_hh"]          # [3, 1, H]
    H = w_hh.shape[1]
    L = params["w_mean"].shape[1]

    def pad_last(a, n):
        return jnp.pad(a, [(0, 0)] * (a.ndim - 1) + [(0, n - a.shape[-1])])

    # each gate block padded to Hp lanes so in-kernel slices are vreg-aligned
    w_ih_cat = jnp.concatenate([pad_last(w_ih[k], Hp) for k in range(3)],
                               axis=1).astype(mxu_dtype)                       # [E, 3Hp]
    w_hh_cat = jnp.concatenate([pad_last(w_hh[k], Hp) for k in range(3)], axis=1)
    w_hh_cat = jnp.pad(w_hh_cat, ((0, Hp - H), (0, 0))).astype(mxu_dtype)      # [Hp, 3Hp]
    # r/z biases pre-summed (input + hidden side); n keeps b_in here, b_hn separate
    b_x = jnp.concatenate([pad_last(b_ih[0] + b_hh[0], Hp),
                           pad_last(b_ih[1] + b_hh[1], Hp),
                           pad_last(b_ih[2], Hp)],
                          axis=1).astype(jnp.float32)                          # [1, 3Hp]
    b_hn = pad_last(b_hh[2], Hp).astype(jnp.float32)                           # [1, Hp]

    w_head = jnp.concatenate([params["w_mean"], params["w_logv"]], axis=1)     # [H, 2L]
    w_head = jnp.pad(w_head, ((0, Hp - H), (0, Lp2 - 2 * L))).astype(mxu_dtype)  # [Hp, Lp2]
    b_head = jnp.concatenate([params["b_mean"], params["b_logv"]], axis=1)
    b_head = jnp.pad(b_head, ((0, 0), (0, Lp2 - 2 * L))).astype(jnp.float32)   # [1, Lp2]
    return w_ih_cat, w_hh_cat, b_x, b_hn, w_head, b_head


def encoder_forward(x_btE, params, *, batch_tile=8):
    """x_btE: [B, T, E] float32 (batch-first, like the PyTorch module)."""
    B, T, E = x_btE.shape
    H = params["w_hh"].shape[1]
    L = params["w_mean"].shape[1]

    Hp = _round_up(H, 128)            # lane-aligned per-gate width
    Lp2 = _round_up(2 * L, 128)       # lane-dense packed head output width
    Bt = max(batch_tile, 8)           # sublane grain
    B_pad = _round_up(max(B, Bt), Bt)
    nB = B_pad // Bt

    w_ih_cat, w_hh_cat, b_x, b_hn, w_head, b_head = _pack_params(params, Hp, Lp2)

    # pad batch to the sublane grain and lay each batch tile out time-major:
    # [nB, T*Bt, E] with row = t*Bt + b, so the hoisted in-kernel projection is
    # one matmul and the per-step gi reads are leading-index views.
    x_p = jnp.zeros((B_pad, T, E), jnp.bfloat16).at[:B].set(x_btE.astype(jnp.bfloat16))
    x_p = x_p.reshape(nB, Bt, T, E).transpose(0, 2, 1, 3).reshape(nB, T * Bt, E)

    # explicit scoped-VMEM budget (double-buffered inputs + scratch + output)
    est_bytes = (2 * (T * Bt * E) * 2
                 + 2 * (E * 3 * Hp + Hp * 3 * Hp + Hp * Lp2) * 2
                 + T * Bt * 3 * Hp * 4
                 + 2 * Bt * Lp2 * 4)
    vmem_limit = int(min(max(4 * est_bytes, 16 << 20), 48 << 20))

    kernel = functools.partial(encoder_kernel, latent_size=L)

    # TODO(synk): for long sequences, stream gi with a T-tiled ("arbitrary") grid
    # axis (h carried in VMEM scratch across grid steps) instead of holding the
    # whole-sequence f32 gi scratch; and optionally keep gate math in bf16 on
    # v6e/v7x behind a per-generation flag.
    out = pl.pallas_call(
        kernel,
        out_shape=jax.ShapeDtypeStruct((B_pad, Lp2), jnp.float32),
        grid_spec=pltpu.PrefetchScalarGridSpec(
            num_scalar_prefetch=0,
            grid=(nB,),
            in_specs=[
                pl.BlockSpec((1, T * Bt, E), lambda i: (i, 0, 0)),   # x (per batch tile)
                pl.BlockSpec((E, 3 * Hp), lambda i: (0, 0)),         # W_ih (replicated)
                pl.BlockSpec((Hp, 3 * Hp), lambda i: (0, 0)),        # W_hh
                pl.BlockSpec((1, 3 * Hp), lambda i: (0, 0)),         # fused r/z/n bias
                pl.BlockSpec((1, Hp), lambda i: (0, 0)),             # b_hn
                pl.BlockSpec((Hp, Lp2), lambda i: (0, 0)),           # head weights
                pl.BlockSpec((1, Lp2), lambda i: (0, 0)),            # head bias
            ],
            out_specs=pl.BlockSpec((Bt, Lp2), lambda i: (i, 0)),
            scratch_shapes=[pltpu.VMEM((T, Bt, 3 * Hp), jnp.float32)],
        ),
        compiler_params=pltpu.CompilerParams(
            dimension_semantics=("parallel",),       # batch tiles independent -> v7x megacore
            vmem_limit_bytes=vmem_limit,
        ),
    )(x_p, w_ih_cat, w_hh_cat, b_x, b_hn, w_head, b_head)

    mean = out[:B, :L]
    logv = out[:B, L:2 * L]
    return mean, logv


def init_params(key, input_size, hidden_size, latent_size):
    """Deterministic synthetic init (PyTorch-like uniform(-1/sqrt(H), 1/sqrt(H)))."""
    ks = jax.random.split(key, 8)
    bound = 1.0 / jnp.sqrt(hidden_size)
    u = lambda k, shape: jax.random.uniform(k, shape, jnp.float32, -bound, bound)
    return {
        "w_ih":   u(ks[0], (3, input_size, hidden_size)),
        "w_hh":   u(ks[1], (3, hidden_size, hidden_size)),
        "b_ih":   u(ks[2], (3, 1, hidden_size)),
        "b_hh":   u(ks[3], (3, 1, hidden_size)),
        "w_mean": u(ks[4], (hidden_size, latent_size)),
        "b_mean": u(ks[5], (1, latent_size)),
        "w_logv": u(ks[6], (hidden_size, latent_size)),
        "b_logv": u(ks[7], (1, latent_size)),
    }


def reference_forward(x_btE, params):
    """Pure-JAX (f32) reference of the PyTorch Encoder.forward (n_layers=1, unidir)."""
    B, T, E = x_btE.shape
    H = params["w_hh"].shape[1]

    def step(h, x_t):
        gi_r = x_t @ params["w_ih"][0] + params["b_ih"][0]
        gi_z = x_t @ params["w_ih"][1] + params["b_ih"][1]
        gi_n = x_t @ params["w_ih"][2] + params["b_ih"][2]
        gh_r = h @ params["w_hh"][0] + params["b_hh"][0]
        gh_z = h @ params["w_hh"][1] + params["b_hh"][1]
        gh_n = h @ params["w_hh"][2] + params["b_hh"][2]
        r = jax.nn.sigmoid(gi_r + gh_r)
        z = jax.nn.sigmoid(gi_z + gh_z)
        n = jnp.tanh(gi_n + r * gh_n)
        h_new = (1.0 - z) * n + z * h
        return h_new, None

    h0 = jnp.zeros((B, H), jnp.float32)
    h_last, _ = lax.scan(step, h0, jnp.transpose(x_btE, (1, 0, 2)))
    mean = h_last @ params["w_mean"] + params["b_mean"]
    logv = -jnp.abs(h_last @ params["w_logv"] + params["b_logv"])
    return mean, logv


if __name__ == "__main__":
    # Small shapes consistent with the module's forward: [batch, seq, embed]
    B, T, E = 2, 8, 32
    H, L = 32, 16          # hidden_size, latent_size (n_layers=1, unidirectional)

    key = jax.random.PRNGKey(0)
    k_x, k_p = jax.random.split(key)
    x = jax.random.normal(k_x, (B, T, E), dtype=jnp.float32)
    params = init_params(k_p, E, H, L)

    mean, logv = encoder_forward(x, params)
    mean = jax.block_until_ready(mean)
    logv = jax.block_until_ready(logv)

    # sanity check against pure-JAX f32 reference (loose tol: bf16 MXU operands)
    mean_ref, logv_ref = reference_forward(x, params)
    assert mean.shape == (B, L) and logv.shape == (B, L)
    assert jnp.allclose(mean, mean_ref, atol=2e-2, rtol=2e-2)
    assert jnp.allclose(logv, logv_ref, atol=2e-2, rtol=2e-2)
    assert bool(jnp.all(logv <= 0.0))

    print("KERNEL_OK")
</pallas_src>

<mosaic_0001>
module attributes {stable_mosaic.version = 11 : i64} {
  func.func @encoder_kernel(%arg0: i32, %arg1: memref<1x64x32xbf16, #tpu.memory_space<vmem>>, %arg2: memref<32x384xbf16, #tpu.memory_space<vmem>>, %arg3: memref<128x384xbf16, #tpu.memory_space<vmem>>, %arg4: memref<1x384xf32, #tpu.memory_space<vmem>>, %arg5: memref<1x128xf32, #tpu.memory_space<vmem>>, %arg6: memref<128x128xbf16, #tpu.memory_space<vmem>>, %arg7: memref<1x128xf32, #tpu.memory_space<vmem>>, %arg8: memref<8x128xf32, #tpu.memory_space<vmem>>, %arg9: memref<8x8x384xf32, #tpu.memory_space<vmem>>) attributes {dimension_semantics = [#tpu.dimension_semantics<parallel>], iteration_bounds = array<i64: 1>, scalar_prefetch = 0 : i64, scratch_operands = 1 : i64, tpu.core_type = #tpu.core_type<tc>, window_params = [{transform_indices = @transform_0, window_bounds = array<i64: 1, 64, 32>}, {pipeline_mode = #tpu.pipeline_mode<synchronous>, transform_indices = @transform_1, window_bounds = array<i64: 32, 384>}, {pipeline_mode = #tpu.pipeline_mode<synchronous>, transform_indices = @transform_2, window_bounds = array<i64: 128, 384>}, {pipeline_mode = #tpu.pipeline_mode<synchronous>, transform_indices = @transform_3, window_bounds = array<i64: 1, 384>}, {pipeline_mode = #tpu.pipeline_mode<synchronous>, transform_indices = @transform_4, window_bounds = array<i64: 1, 128>}, {pipeline_mode = #tpu.pipeline_mode<synchronous>, transform_indices = @transform_5, window_bounds = array<i64: 128, 128>}, {pipeline_mode = #tpu.pipeline_mode<synchronous>, transform_indices = @transform_6, window_bounds = array<i64: 1, 128>}, {transform_indices = @transform_7, window_bounds = array<i64: 8, 128>}]} {
    %c0 = arith.constant 0 : index
    %c0_0 = arith.constant 0 : index
    %c0_1 = arith.constant 0 : index
    %0 = vector.load %arg1[%c0, %c0_0, %c0_1] : memref<1x64x32xbf16, #tpu.memory_space<vmem>>, vector<1x64x32xbf16>
    %1 = vector.shape_cast %0 : vector<1x64x32xbf16> to vector<64x32xbf16>
    %c0_2 = arith.constant 0 : index
    %c0_3 = arith.constant 0 : index
    %2 = vector.load %arg2[%c0_2, %c0_3] : memref<32x384xbf16, #tpu.memory_space<vmem>>, vector<32x384xbf16>
    %cst = arith.constant dense<0.000000e+00> : vector<64x384xf32>
    %3 = tpu.matmul %1, %2, %cst {dimension_numbers = #tpu.dot_dimension_numbers<[1], [0], [0], [1], [0, 0, 1, 1], [], []>} : vector<64x32xbf16>, vector<32x384xbf16>, vector<64x384xf32> -> vector<64x384xf32>
    %c0_4 = arith.constant 0 : index
    %c0_5 = arith.constant 0 : index
    %4 = vector.load %arg4[%c0_4, %c0_5] : memref<1x384xf32, #tpu.memory_space<vmem>>, vector<1x384xf32>
    %5 = vector.broadcast %4 : vector<1x384xf32> to vector<64x384xf32>
    %6 = arith.addf %3, %5 : vector<64x384xf32>
    %7 = vector.shape_cast %6 : vector<64x384xf32> to vector<8x8x384xf32>
    %c0_6 = arith.constant 0 : index
    %c0_7 = arith.constant 0 : index
    %c0_8 = arith.constant 0 : index
    %8 = vector.load %arg9[%c0_6, %c0_7, %c0_8] : memref<8x8x384xf32, #tpu.memory_space<vmem>>, vector<8x8x384xf32>
    tpu.vector_store %arg9[%c0_6, %c0_7, %c0_8], %7 {strides = array<i32>} : memref<8x8x384xf32, #tpu.memory_space<vmem>>, vector<8x8x384xf32>,
    %c0_9 = arith.constant 0 : index
    %c0_10 = arith.constant 0 : index
    %9 = vector.load %arg5[%c0_9, %c0_10] : memref<1x128xf32, #tpu.memory_space<vmem>>, vector<1x128xf32>
    %10 = vector.shape_cast %9 : vector<1x128xf32> to vector<1x128xf32>
    %11 = vector.broadcast %10 : vector<1x128xf32> to vector<8x128xf32>
    %c0_11 = arith.constant 0 : index
    %c0_12 = arith.constant 0 : index
    %12 = vector.load %arg3[%c0_11, %c0_12] : memref<128x384xbf16, #tpu.memory_space<vmem>>, vector<128x384xbf16>
    %cst_13 = arith.constant 0.000000e+00 : f32
    %13 = vector.broadcast %cst_13 : f32 to vector<8x128xf32>
    %c0_i32 = arith.constant 0 : i32
    %14 = arith.index_cast %c0_i32 : i32 to index
    %c0_14 = arith.constant 0 : index
    %c0_15 = arith.constant 0 : index
    %15 = vector.load %arg9[%14, %c0_14, %c0_15] : memref<8x8x384xf32, #tpu.memory_space<vmem>>, vector<1x8x384xf32>
    %16 = vector.shape_cast %15 : vector<1x8x384xf32> to vector<8x384xf32>
    %17 = arith.truncf %13 : vector<8x128xf32> to vector<8x128xbf16>
    %cst_16 = arith.constant dense<0.000000e+00> : vector<8x384xf32>
    %18 = tpu.matmul %17, %12, %cst_16 {dimension_numbers = #tpu.dot_dimension_numbers<[1], [0], [0], [1], [0, 0, 1, 1], [], []>} : vector<8x128xbf16>, vector<128x384xbf16>, vector<8x384xf32> -> vector<8x384xf32>
    %19 = vector.extract_strided_slice %16 {offsets = [0, 0], sizes = [8, 128], strides = [1, 1]} : vector<8x384xf32> to vector<8x128xf32>
    %20 = vector.extract_strided_slice %18 {offsets = [0, 0], sizes = [8, 128], strides = [1, 1]} : vector<8x384xf32> to vector<8x128xf32>
    %21 = arith.addf %19, %20 : vector<8x128xf32>
    %22 = arith.negf %21 : vector<8x128xf32>
    %23 = math.exp %22 : vector<8x128xf32>
    %cst_17 = arith.constant 1.000000e+00 : f32
    %24 = vector.broadcast %cst_17 : f32 to vector<8x128xf32>
    %25 = arith.addf %24, %23 : vector<8x128xf32>
    %26 = arith.divf %24, %25 : vector<8x128xf32>
    %27 = vector.extract_strided_slice %16 {offsets = [0, 128], sizes = [8, 128], strides = [1, 1]} : vector<8x384xf32> to vector<8x128xf32>
    %28 = vector.extract_strided_slice %18 {offsets = [0, 128], sizes = [8, 128], strides = [1, 1]} : vector<8x384xf32> to vector<8x128xf32>
    %29 = arith.addf %27, %28 : vector<8x128xf32>
    %30 = arith.negf %29 : vector<8x128xf32>
    %31 = math.exp %30 : vector<8x128xf32>
    %cst_18 = arith.constant 1.000000e+00 : f32
    %32 = vector.broadcast %cst_18 : f32 to vector<8x128xf32>
    %33 = arith.addf %32, %31 : vector<8x128xf32>
    %34 = arith.divf %32, %33 : vector<8x128xf32>
    %35 = vector.extract_strided_slice %16 {offsets = [0, 256], sizes = [8, 128], strides = [1, 1]} : vector<8x384xf32> to vector<8x128xf32>
    %36 = vector.extract_strided_slice %18 {offsets = [0, 256], sizes = [8, 128], strides = [1, 1]} : vector<8x384xf32> to vector<8x128xf32>
    %37 = arith.addf %36, %11 : vector<8x128xf32>
    %38 = arith.mulf %26, %37 : vector<8x128xf32>
    %39 = arith.addf %35, %38 : vector<8x128xf32>
    %40 = math.tanh %39 : vector<8x128xf32>
    %cst_19 = arith.constant 1.000000e+00 : f32
    %41 = vector.broadcast %cst_19 : f32 to vector<8x128xf32>
    %42 = arith.subf %41, %34 : vector<8x128xf32>
    %43 = arith.mulf %42, %40 : vector<8x128xf32>
    %44 = arith.mulf %34, %13 : vector<8x128xf32>
    %45 = arith.addf %43, %44 : vector<8x128xf32>
    %c1_i32 = arith.constant 1 : i32
    %46 = arith.index_cast %c1_i32 : i32 to index
    %c0_20 = arith.constant 0 : index
    %c0_21 = arith.constant 0 : index
    %47 = vector.load %arg9[%46, %c0_20, %c0_21] : memref<8x8x384xf32, #tpu.memory_space<vmem>>, vector<1x8x384xf32>
    %48 = vector.shape_cast %47 : vector<1x8x384xf32> to vector<8x384xf32>
    %49 = arith.truncf %45 : vector<8x128xf32> to vector<8x128xbf16>
    %cst_22 = arith.constant dense<0.000000e+00> : vector<8x384xf32>
    %50 = tpu.matmul %49, %12, %cst_22 {dimension_numbers = #tpu.dot_dimension_numbers<[1], [0], [0], [1], [0, 0, 1, 1], [], []>} : vector<8x128xbf16>, vector<128x384xbf16>, vector<8x384xf32> -> vector<8x384xf32>
    %51 = vector.extract_strided_slice %48 {offsets = [0, 0], sizes = [8, 128], strides = [1, 1]} : vector<8x384xf32> to vector<8x128xf32>
    %52 = vector.extract_strided_slice %50 {offsets = [0, 0], sizes = [8, 128], strides = [1, 1]} : vector<8x384xf32> to vector<8x128xf32>
    %53 = arith.addf %51, %52 : vector<8x128xf32>
    %54 = arith.negf %53 : vector<8x128xf32>
    %55 = math.exp %54 : vector<8x128xf32>
    %cst_23 = arith.constant 1.000000e+00 : f32
    %56 = vector.broadcast %cst_23 : f32 to vector<8x128xf32>
    %57 = arith.addf %56, %55 : vector<8x128xf32>
    %58 = arith.divf %56, %57 : vector<8x128xf32>
    %59 = vector.extract_strided_slice %48 {offsets = [0, 128], sizes = [8, 128], strides = [1, 1]} : vector<8x384xf32> to vector<8x128xf32>
    %60 = vector.extract_strided_slice %50 {offsets = [0, 128], sizes = [8, 128], strides = [1, 1]} : vector<8x384xf32> to vector<8x128xf32>
    %61 = arith.addf %59, %60 : vector<8x128xf32>
    %62 = arith.negf %61 : vector<8x128xf32>
    %63 = math.exp %62 : vector<8x128xf32>
    %cst_24 = arith.constant 1.000000e+00 : f32
    %64 = vector.broadcast %cst_24 : f32 to vector<8x128xf32>
    %65 = arith.addf %64, %63 : vector<8x128xf32>
    %66 = arith.divf %64, %65 : vector<8x128xf32>
    %67 = vector.extract_strided_slice %48 {offsets = [0, 256], sizes = [8, 128], strides = [1, 1]} : vector<8x384xf32> to vector<8x128xf32>
    %68 = vector.extract_strided_slice %50 {offsets = [0, 256], sizes = [8, 128], strides = [1, 1]} : vector<8x384xf32> to vector<8x128xf32>
    %69 = arith.addf %68, %11 : vector<8x128xf32>
    %70 = arith.mulf %58, %69 : vector<8x128xf32>
    %71 = arith.addf %67, %70 : vector<8x128xf32>
    %72 = math.tanh %71 : vector<8x128xf32>
    %cst_25 = arith.constant 1.000000e+00 : f32
    %73 = vector.broadcast %cst_25 : f32 to vector<8x128xf32>
    %74 = arith.subf %73, %66 : vector<8x128xf32>
    %75 = arith.mulf %74, %72 : vector<8x128xf32>
    %76 = arith.mulf %66, %45 : vector<8x128xf32>
    %77 = arith.addf %75, %76 : vector<8x128xf32>
    %c2_i32 = arith.constant 2 : i32
    %78 = arith.index_cast %c2_i32 : i32 to index
    %c0_26 = arith.constant 0 : index
    %c0_27 = arith.constant 0 : index
    %79 = vector.load %arg9[%78, %c0_26, %c0_27] : memref<8x8x384xf32, #tpu.memory_space<vmem>>, vector<1x8x384xf32>
    %80 = vector.shape_cast %79 : vector<1x8x384xf32> to vector<8x384xf32>
    %81 = arith.truncf %77 : vector<8x128xf32> to vector<8x128xbf16>
    %cst_28 = arith.constant dense<0.000000e+00> : vector<8x384xf32>
    %82 = tpu.matmul %81, %12, %cst_28 {dimension_numbers = #tpu.dot_dimension_numbers<[1], [0], [0], [1], [0, 0, 1, 1], [], []>} : vector<8x128xbf16>, vector<128x384xbf16>, vector<8x384xf32> -> vector<8x384xf32>
    %83 = vector.extract_strided_slice %80 {offsets = [0, 0], sizes = [8, 128], strides = [1, 1]} : vector<8x384xf32> to vector<8x128xf32>
    %84 = vector.extract_strided_slice %82 {offsets = [0, 0], sizes = [8, 128], strides = [1, 1]} : vector<8x384xf32> to vector<8x128xf32>
    %85 = arith.addf %83, %84 : vector<8x128xf32>
    %86 = arith.negf %85 : vector<8x128xf32>
    %87 = math.exp %86 : vector<8x128xf32>
    %cst_29 = arith.constant 1.000000e+00 : f32
    %88 = vector.broadcast %cst_29 : f32 to vector<8x128xf32>
    %89 = arith.addf %88, %87 : vector<8x128xf32>
    %90 = arith.divf %88, %89 : vector<8x128xf32>
    %91 = vector.extract_strided_slice %80 {offsets = [0, 128], sizes = [8, 128], strides = [1, 1]} : vector<8x384xf32> to vector<8x128xf32>
    %92 = vector.extract_strided_slice %82 {offsets = [0, 128], sizes = [8, 128], strides = [1, 1]} : vector<8x384xf32> to vector<8x128xf32>
    %93 = arith.addf %91, %92 : vector<8x128xf32>
    %94 = arith.negf %93 : vector<8x128xf32>
    %95 = math.exp %94 : vector<8x128xf32>
    %cst_30 = arith.constant 1.000000e+00 : f32
    %96 = vector.broadcast %cst_30 : f32 to vector<8x128xf32>
    %97 = arith.addf %96, %95 : vector<8x128xf32>
    %98 = arith.divf %96, %97 : vector<8x128xf32>
    %99 = vector.extract_strided_slice %80 {offsets = [0, 256], sizes = [8, 128], strides = [1, 1]} : vector<8x384xf32> to vector<8x128xf32>
    %100 = vector.extract_strided_slice %82 {offsets = [0, 256], sizes = [8, 128], strides = [1, 1]} : vector<8x384xf32> to vector<8x128xf32>
    %101 = arith.addf %100, %11 : vector<8x128xf32>
    %102 = arith.mulf %90, %101 : vector<8x128xf32>
    %103 = arith.addf %99, %102 : vector<8x128xf32>
    %104 = math.tanh %103 : vector<8x128xf32>
    %cst_31 = arith.constant 1.000000e+00 : f32
    %105 = vector.broadcast %cst_31 : f32 to vector<8x128xf32>
    %106 = arith.subf %105, %98 : vector<8x128xf32>
    %107 = arith.mulf %106, %104 : vector<8x128xf32>
    %108 = arith.mulf %98, %77 : vector<8x128xf32>
    %109 = arith.addf %107, %108 : vector<8x128xf32>
    %c3_i32 = arith.constant 3 : i32
    %110 = arith.index_cast %c3_i32 : i32 to index
    %c0_32 = arith.constant 0 : index
    %c0_33 = arith.constant 0 : index
    %111 = vector.load %arg9[%110, %c0_32, %c0_33] : memref<8x8x384xf32, #tpu.memory_space<vmem>>, vector<1x8x384xf32>
    %112 = vector.shape_cast %111 : vector<1x8x384xf32> to vector<8x384xf32>
    %113 = arith.truncf %109 : vector<8x128xf32> to vector<8x128xbf16>
    %cst_34 = arith.constant dense<0.000000e+00> : vector<8x384xf32>
    %114 = tpu.matmul %113, %12, %cst_34 {dimension_numbers = #tpu.dot_dimension_numbers<[1], [0], [0], [1], [0, 0, 1, 1], [], []>} : vector<8x128xbf16>, vector<128x384xbf16>, vector<8x384xf32> -> vector<8x384xf32>
    %115 = vector.extract_strided_slice %112 {offsets = [0, 0], sizes = [8, 128], strides = [1, 1]} : vector<8x384xf32> to vector<8x128xf32>
    %116 = vector.extract_strided_slice %114 {offsets = [0, 0], sizes = [8, 128], strides = [1, 1]} : vector<8x384xf32> to vector<8x128xf32>
    %117 = arith.addf %115, %116 : vector<8x128xf32>
    %118 = arith.negf %117 : vector<8x128xf32>
    %119 = math.exp %118 : vector<8x128xf32>
    %cst_35 = arith.constant 1.000000e+00 : f32
    %120 = vector.broadcast %cst_35 : f32 to vector<8x128xf32>
    %121 = arith.addf %120, %119 : vector<8x128xf32>
    %122 = arith.divf %120, %121 : vector<8x128xf32>
    %123 = vector.extract_strided_slice %112 {offsets = [0, 128], sizes = [8, 128], strides = [1, 1]} : vector<8x384xf32> to vector<8x128xf32>
    %124 = vector.extract_strided_slice %114 {offsets = [0, 128], sizes = [8, 128], strides = [1, 1]} : vector<8x384xf32> to vector<8x128xf32>
    %125 = arith.addf %123, %124 : vector<8x128xf32>
    %126 = arith.negf %125 : vector<8x128xf32>
    %127 = math.exp %126 : vector<8x128xf32>
    %cst_36 = arith.constant 1.000000e+00 : f32
    %128 = vector.broadcast %cst_36 : f32 to vector<8x128xf32>
    %129 = arith.addf %128, %127 : vector<8x128xf32>
    %130 = arith.divf %128, %129 : vector<8x128xf32>
    %131 = vector.extract_strided_slice %112 {offsets = [0, 256], sizes = [8, 128], strides = [1, 1]} : vector<8x384xf32> to vector<8x128xf32>
    %132 = vector.extract_strided_slice %114 {offsets = [0, 256], sizes = [8, 128], strides = [1, 1]} : vector<8x384xf32> to vector<8x128xf32>
    %133 = arith.addf %132, %11 : vector<8x128xf32>
    %134 = arith.mulf %122, %133 : vector<8x128xf32>
    %135 = arith.addf %131, %134 : vector<8x128xf32>
    %136 = math.tanh %135 : vector<8x128xf32>
    %cst_37 = arith.constant 1.000000e+00 : f32
    %137 = vector.broadcast %cst_37 : f32 to vector<8x128xf32>
    %138 = arith.subf %137, %130 : vector<8x128xf32>
    %139 = arith.mulf %138, %136 : vector<8x128xf32>
    %140 = arith.mulf %130, %109 : vector<8x128xf32>
    %141 = arith.addf %139, %140 : vector<8x128xf32>
    %c4_i32 = arith.constant 4 : i32
    %142 = arith.index_cast %c4_i32 : i32 to index
    %c0_38 = arith.constant 0 : index
    %c0_39 = arith.constant 0 : index
    %143 = vector.load %arg9[%142, %c0_38, %c0_39] : memref<8x8x384xf32, #tpu.memory_space<vmem>>, vector<1x8x384xf32>
    %144 = vector.shape_cast %143 : vector<1x8x384xf32> to vector<8x384xf32>
    %145 = arith.truncf %141 : vector<8x128xf32> to vector<8x128xbf16>
    %cst_40 = arith.constant dense<0.000000e+00> : vector<8x384xf32>
    %146 = tpu.matmul %145, %12, %cst_40 {dimension_numbers = #tpu.dot_dimension_numbers<[1], [0], [0], [1], [0, 0, 1, 1], [], []>} : vector<8x128xbf16>, vector<128x384xbf16>, vector<8x384xf32> -> vector<8x384xf32>
    %147 = vector.extract_strided_slice %144 {offsets = [0, 0], sizes = [8, 128], strides = [1, 1]} : vector<8x384xf32> to vector<8x128xf32>
    %148 = vector.extract_strided_slice %146 {offsets = [0, 0], sizes = [8, 128], strides = [1, 1]} : vector<8x384xf32> to vector<8x128xf32>
    %149 = arith.addf %147, %148 : vector<8x128xf32>
    %150 = arith.negf %149 : vector<8x128xf32>
    %151 = math.exp %150 : vector<8x128xf32>
    %cst_41 = arith.constant 1.000000e+00 : f32
    %152 = vector.broadcast %cst_41 : f32 to vector<8x128xf32>
    %153 = arith.addf %152, %151 : vector<8x128xf32>
    %154 = arith.divf %152, %153 : vector<8x128xf32>
    %155 = vector.extract_strided_slice %144 {offsets = [0, 128], sizes = [8, 128], strides = [1, 1]} : vector<8x384xf32> to vector<8x128xf32>
    %156 = vector.extract_strided_slice %146 {offsets = [0, 128], sizes = [8, 128], strides = [1, 1]} : vector<8x384xf32> to vector<8x128xf32>
    %157 = arith.addf %155, %156 : vector<8x128xf32>
    %158 = arith.negf %157 : vector<8x128xf32>
    %159 = math.exp %158 : vector<8x128xf32>
    %cst_42 = arith.constant 1.000000e+00 : f32
    %160 = vector.broadcast %cst_42 : f32 to vector<8x128xf32>
    %161 = arith.addf %160, %159 : vector<8x128xf32>
    %162 = arith.divf %160, %161 : vector<8x128xf32>
    %163 = vector.extract_strided_slice %144 {offsets = [0, 256], sizes = [8, 128], strides = [1, 1]} : vector<8x384xf32> to vector<8x128xf32>
    %164 = vector.extract_strided_slice %146 {offsets = [0, 256], sizes = [8, 128], strides = [1, 1]} : vector<8x384xf32> to vector<8x128xf32>
    %165 = arith.addf %164, %11 : vector<8x128xf32>
    %166 = arith.mulf %154, %165 : vector<8x128xf32>
    %167 = arith.addf %163, %166 : vector<8x128xf32>
    %168 = math.tanh %167 : vector<8x128xf32>
    %cst_43 = arith.constant 1.000000e+00 : f32
    %169 = vector.broadcast %cst_43 : f32 to vector<8x128xf32>
    %170 = arith.subf %169, %162 : vector<8x128xf32>
    %171 = arith.mulf %170, %168 : vector<8x128xf32>
    %172 = arith.mulf %162, %141 : vector<8x128xf32>
    %173 = arith.addf %171, %172 : vector<8x128xf32>
    %c5_i32 = arith.constant 5 : i32
    %174 = arith.index_cast %c5_i32 : i32 to index
    %c0_44 = arith.constant 0 : index
    %c0_45 = arith.constant 0 : index
    %175 = vector.load %arg9[%174, %c0_44, %c0_45] : memref<8x8x384xf32, #tpu.memory_space<vmem>>, vector<1x8x384xf32>
    %176 = vector.shape_cast %175 : vector<1x8x384xf32> to vector<8x384xf32>
    %177 = arith.truncf %173 : vector<8x128xf32> to vector<8x128xbf16>
    %cst_46 = arith.constant dense<0.000000e+00> : vector<8x384xf32>
    %178 = tpu.matmul %177, %12, %cst_46 {dimension_numbers = #tpu.dot_dimension_numbers<[1], [0], [0], [1], [0, 0, 1, 1], [], []>} : vector<8x128xbf16>, vector<128x384xbf16>, vector<8x384xf32> -> vector<8x384xf32>
    %179 = vector.extract_strided_slice %176 {offsets = [0, 0], sizes = [8, 128], strides = [1, 1]} : vector<8x384xf32> to vector<8x128xf32>
    %180 = vector.extract_strided_slice %178 {offsets = [0, 0], sizes = [8, 128], strides = [1, 1]} : vector<8x384xf32> to vector<8x128xf32>
    %181 = arith.addf %179, %180 : vector<8x128xf32>
    %182 = arith.negf %181 : vector<8x128xf32>
    %183 = math.exp %182 : vector<8x128xf32>
    %cst_47 = arith.constant 1.000000e+00 : f32
    %184 = vector.broadcast %cst_47 : f32 to vector<8x128xf32>
    %185 = arith.addf %184, %183 : vector<8x128xf32>
    %186 = arith.divf %184, %185 : vector<8x128xf32>
    %187 = vector.extract_strided_slice %176 {offsets = [0, 128], sizes = [8, 128], strides = [1, 1]} : vector<8x384xf32> to vector<8x128xf32>
    %188 = vector.extract_strided_slice %178 {offsets = [0, 128], sizes = [8, 128], strides = [1, 1]} : vector<8x384xf32> to vector<8x128xf32>
    %189 = arith.addf %187, %188 : vector<8x128xf32>
    %190 = arith.negf %189 : vector<8x128xf32>
    %191 = math.exp %190 : vector<8x128xf32>
    %cst_48 = arith.constant 1.000000e+00 : f32
    %192 = vector.broadcast %cst_48 : f32 to vector<8x128xf32>
    %193 = arith.addf %192, %191 : vector<8x128xf32>
    %194 = arith.divf %192, %193 : vector<8x128xf32>
    %195 = vector.extract_strided_slice %176 {offsets = [0, 256], sizes = [8, 128], strides = [1, 1]} : vector<8x384xf32> to vector<8x128xf32>
    %196 = vector.extract_strided_slice %178 {offsets = [0, 256], sizes = [8, 128], strides = [1, 1]} : vector<8x384xf32> to vector<8x128xf32>
    %197 = arith.addf %196, %11 : vector<8x128xf32>
    %198 = arith.mulf %186, %197 : vector<8x128xf32>
    %199 = arith.addf %195, %198 : vector<8x128xf32>
    %200 = math.tanh %199 : vector<8x128xf32>
    %cst_49 = arith.constant 1.000000e+00 : f32
    %201 = vector.broadcast %cst_49 : f32 to vector<8x128xf32>
    %202 = arith.subf %201, %194 : vector<8x128xf32>
    %203 = arith.mulf %202, %200 : vector<8x128xf32>
    %204 = arith.mulf %194, %173 : vector<8x128xf32>
    %205 = arith.addf %203, %204 : vector<8x128xf32>
    %c6_i32 = arith.constant 6 : i32
    %206 = arith.index_cast %c6_i32 : i32 to index
    %c0_50 = arith.constant 0 : index
    %c0_51 = arith.constant 0 : index
    %207 = vector.load %arg9[%206, %c0_50, %c0_51] : memref<8x8x384xf32, #tpu.memory_space<vmem>>, vector<1x8x384xf32>
    %208 = vector.shape_cast %207 : vector<1x8x384xf32> to vector<8x384xf32>
    %209 = arith.truncf %205 : vector<8x128xf32> to vector<8x128xbf16>
    %cst_52 = arith.constant dense<0.000000e+00> : vector<8x384xf32>
    %210 = tpu.matmul %209, %12, %cst_52 {dimension_numbers = #tpu.dot_dimension_numbers<[1], [0], [0], [1], [0, 0, 1, 1], [], []>} : vector<8x128xbf16>, vector<128x384xbf16>, vector<8x384xf32> -> vector<8x384xf32>
    %211 = vector.extract_strided_slice %208 {offsets = [0, 0], sizes = [8, 128], strides = [1, 1]} : vector<8x384xf32> to vector<8x128xf32>
    %212 = vector.extract_strided_slice %210 {offsets = [0, 0], sizes = [8, 128], strides = [1, 1]} : vector<8x384xf32> to vector<8x128xf32>
    %213 = arith.addf %211, %212 : vector<8x128xf32>
    %214 = arith.negf %213 : vector<8x128xf32>
    %215 = math.exp %214 : vector<8x128xf32>
    %cst_53 = arith.constant 1.000000e+00 : f32
    %216 = vector.broadcast %cst_53 : f32 to vector<8x128xf32>
    %217 = arith.addf %216, %215 : vector<8x128xf32>
    %218 = arith.divf %216, %217 : vector<8x128xf32>
    %219 = vector.extract_strided_slice %208 {offsets = [0, 128], sizes = [8, 128], strides = [1, 1]} : vector<8x384xf32> to vector<8x128xf32>
    %220 = vector.extract_strided_slice %210 {offsets = [0, 128], sizes = [8, 128], strides = [1, 1]} : vector<8x384xf32> to vector<8x128xf32>
    %221 = arith.addf %219, %220 : vector<8x128xf32>
    %222 = arith.negf %221 : vector<8x128xf32>
    %223 = math.exp %222 : vector<8x128xf32>
    %cst_54 = arith.constant 1.000000e+00 : f32
    %224 = vector.broadcast %cst_54 : f32 to vector<8x128xf32>
    %225 = arith.addf %224, %223 : vector<8x128xf32>
    %226 = arith.divf %224, %225 : vector<8x128xf32>
    %227 = vector.extract_strided_slice %208 {offsets = [0, 256], sizes = [8, 128], strides = [1, 1]} : vector<8x384xf32> to vector<8x128xf32>
    %228 = vector.extract_strided_slice %210 {offsets = [0, 256], sizes = [8, 128], strides = [1, 1]} : vector<8x384xf32> to vector<8x128xf32>
    %229 = arith.addf %228, %11 : vector<8x128xf32>
    %230 = arith.mulf %218, %229 : vector<8x128xf32>
    %231 = arith.addf %227, %230 : vector<8x128xf32>
    %232 = math.tanh %231 : vector<8x128xf32>
    %cst_55 = arith.constant 1.000000e+00 : f32
    %233 = vector.broadcast %cst_55 : f32 to vector<8x128xf32>
    %234 = arith.subf %233, %226 : vector<8x128xf32>
    %235 = arith.mulf %234, %232 : vector<8x128xf32>
    %236 = arith.mulf %226, %205 : vector<8x128xf32>
    %237 = arith.addf %235, %236 : vector<8x128xf32>
    %c7_i32 = arith.constant 7 : i32
    %238 = arith.index_cast %c7_i32 : i32 to index
    %c0_56 = arith.constant 0 : index
    %c0_57 = arith.constant 0 : index
    %239 = vector.load %arg9[%238, %c0_56, %c0_57] : memref<8x8x384xf32, #tpu.memory_space<vmem>>, vector<1x8x384xf32>
    %240 = vector.shape_cast %239 : vector<1x8x384xf32> to vector<8x384xf32>
    %241 = arith.truncf %237 : vector<8x128xf32> to vector<8x128xbf16>
    %cst_58 = arith.constant dense<0.000000e+00> : vector<8x384xf32>
    %242 = tpu.matmul %241, %12, %cst_58 {dimension_numbers = #tpu.dot_dimension_numbers<[1], [0], [0], [1], [0, 0, 1, 1], [], []>} : vector<8x128xbf16>, vector<128x384xbf16>, vector<8x384xf32> -> vector<8x384xf32>
    %243 = vector.extract_strided_slice %240 {offsets = [0, 0], sizes = [8, 128], strides = [1, 1]} : vector<8x384xf32> to vector<8x128xf32>
    %244 = vector.extract_strided_slice %242 {offsets = [0, 0], sizes = [8, 128], strides = [1, 1]} : vector<8x384xf32> to vector<8x128xf32>
    %245 = arith.addf %243, %244 : vector<8x128xf32>
    %246 = arith.negf %245 : vector<8x128xf32>
    %247 = math.exp %246 : vector<8x128xf32>
    %cst_59 = arith.constant 1.000000e+00 : f32
    %248 = vector.broadcast %cst_59 : f32 to vector<8x128xf32>
    %249 = arith.addf %248, %247 : vector<8x128xf32>
    %250 = arith.divf %248, %249 : vector<8x128xf32>
    %251 = vector.extract_strided_slice %240 {offsets = [0, 128], sizes = [8, 128], strides = [1, 1]} : vector<8x384xf32> to vector<8x128xf32>
    %252 = vector.extract_strided_slice %242 {offsets = [0, 128], sizes = [8, 128], strides = [1, 1]} : vector<8x384xf32> to vector<8x128xf32>
    %253 = arith.addf %251, %252 : vector<8x128xf32>
    %254 = arith.negf %253 : vector<8x128xf32>
    %255 = math.exp %254 : vector<8x128xf32>
    %cst_60 = arith.constant 1.000000e+00 : f32
    %256 = vector.broadcast %cst_60 : f32 to vector<8x128xf32>
    %257 = arith.addf %256, %255 : vector<8x128xf32>
    %258 = arith.divf %256, %257 : vector<8x128xf32>
    %259 = vector.extract_strided_slice %240 {offsets = [0, 256], sizes = [8, 128], strides = [1, 1]} : vector<8x384xf32> to vector<8x128xf32>
    %260 = vector.extract_strided_slice %242 {offsets = [0, 256], sizes = [8, 128], strides = [1, 1]} : vector<8x384xf32> to vector<8x128xf32>
    %261 = arith.addf %260, %11 : vector<8x128xf32>
    %262 = arith.mulf %250, %261 : vector<8x128xf32>
    %263 = arith.addf %259, %262 : vector<8x128xf32>
    %264 = math.tanh %263 : vector<8x128xf32>
    %cst_61 = arith.constant 1.000000e+00 : f32
    %265 = vector.broadcast %cst_61 : f32 to vector<8x128xf32>
    %266 = arith.subf %265, %258 : vector<8x128xf32>
    %267 = arith.mulf %266, %264 : vector<8x128xf32>
    %268 = arith.mulf %258, %237 : vector<8x128xf32>
    %269 = arith.addf %267, %268 : vector<8x128xf32>
    %c8_i32 = arith.constant 8 : i32
    %270 = arith.truncf %269 : vector<8x128xf32> to vector<8x128xbf16>
    %c0_62 = arith.constant 0 : index
    %c0_63 = arith.constant 0 : index
    %271 = vector.load %arg6[%c0_62, %c0_63] : memref<128x128xbf16, #tpu.memory_space<vmem>>, vector<128x128xbf16>
    %cst_64 = arith.constant dense<0.000000e+00> : vector<8x128xf32>
    %272 = tpu.matmul %270, %271, %cst_64 {dimension_numbers = #tpu.dot_dimension_numbers<[1], [0], [0], [1], [0, 0, 1, 1], [], []>} : vector<8x128xbf16>, vector<128x128xbf16>, vector<8x128xf32> -> vector<8x128xf32>
    %c0_65 = arith.constant 0 : index
    %c0_66 = arith.constant 0 : index
    %273 = vector.load %arg7[%c0_65, %c0_66] : memref<1x128xf32, #tpu.memory_space<vmem>>, vector<1x128xf32>
    %274 = vector.broadcast %273 : vector<1x128xf32> to vector<8x128xf32>
    %275 = arith.addf %272, %274 : vector<8x128xf32>
    %276 = tpu.iota {dimensions = array<i32: 1>} : vector<8x128xi32>
    %c16_i32 = arith.constant 16 : i32
    %277 = vector.broadcast %c16_i32 : i32 to vector<8x128xi32>
    %278 = arith.cmpi slt, %276, %277 : vector<8x128xi32>
    %279 = math.absf %275 : vector<8x128xf32>
    %cst_67 = arith.constant 0.000000e+00 : f32
    %280 = vector.broadcast %cst_67 : f32 to vector<8x128xf32>
    %281 = arith.subf %280, %279 : vector<8x128xf32>
    %282 = arith.select %278, %275, %281 : vector<8x128xi1>, vector<8x128xf32>
    %c0_68 = arith.constant 0 : index
    %c0_69 = arith.constant 0 : index
    %283 = vector.load %arg8[%c0_68, %c0_69] : memref<8x128xf32, #tpu.memory_space<vmem>>, vector<8x128xf32>
    tpu.vector_store %arg8[%c0_68, %c0_69], %282 {strides = array<i32>} : memref<8x128xf32, #tpu.memory_space<vmem>>, vector<8x128xf32>,
    return
  }
  func.func @transform_0(%arg0: i32) -> (i32, i32, i32) {
    %c0_i32 = arith.constant 0 : i32
    %c0_i32_0 = arith.constant 0 : i32
    %c0_i32_1 = arith.constant 0 : i32
    return %arg0, %c0_i32, %c0_i32_0 : i32, i32, i32
  }
  func.func @transform_1(%arg0: i32) -> (i32, i32) {
    %c0_i32 = arith.constant 0 : i32
    %c0_i32_0 = arith.constant 0 : i32
    %c0_i32_1 = arith.constant 0 : i32
    return %c0_i32, %c0_i32_0 : i32, i32
  }
  func.func @transform_2(%arg0: i32) -> (i32, i32) {
    %c0_i32 = arith.constant 0 : i32
    %c0_i32_0 = arith.constant 0 : i32
    %c0_i32_1 = arith.constant 0 : i32
    return %c0_i32, %c0_i32_0 : i32, i32
  }
  func.func @transform_3(%arg0: i32) -> (i32, i32) {
    %c0_i32 = arith.constant 0 : i32
    %c0_i32_0 = arith.constant 0 : i32
    %c0_i32_1 = arith.constant 0 : i32
    return %c0_i32, %c0_i32_0 : i32, i32
  }
  func.func @transform_4(%arg0: i32) -> (i32, i32) {
    %c0_i32 = arith.constant 0 : i32
    %c0_i32_0 = arith.constant 0 : i32
    %c0_i32_1 = arith.constant 0 : i32
    return %c0_i32, %c0_i32_0 : i32, i32
  }
  func.func @transform_5(%arg0: i32) -> (i32, i32) {
    %c0_i32 = arith.constant 0 : i32
    %c0_i32_0 = arith.constant 0 : i32
    %c0_i32_1 = arith.constant 0 : i32
    return %c0_i32, %c0_i32_0 : i32, i32
  }
  func.func @transform_6(%arg0: i32) -> (i32, i32) {
    %c0_i32 = arith.constant 0 : i32
    %c0_i32_0 = arith.constant 0 : i32
    %c0_i32_1 = arith.constant 0 : i32
    return %c0_i32, %c0_i32_0 : i32, i32
  }
  func.func @transform_7(%arg0: i32) -> (i32, i32) {
    %c0_i32 = arith.constant 0 : i32
    %c0_i32_0 = arith.constant 0 : i32
    return %arg0, %c0_i32 : i32, i32
  }
}

</mosaic_0001>

<llo_original>
// kernel: tpu_custom_call.1
$region0: #{tpu_custom_call.1}
  #allocation0 [shape = 'u32[]', space=smem, size = 0x4, offset = 0x4, fixed_abs, tag = 'smem constant byte address 0x4 - core index']
  #allocation1 [shape = 'u32[144,128]{1,0:T(1,128)}', space=vmem, size = 0x12000, scoped, tag = 'internal scratch']
  #allocation2 [shape = 'f32[8,8,384]{2,1,0:T(8,128)}', space=vmem, size = 0x18000, scoped, tag = 'scratch operand']
  %s0 = inlined_call_operand.vmem [shape: bf16[1,64,32], index: 0, kind: input, shape index: {}]
  %s1 = inlined_call_operand.hbm [shape: bf16[32,384], index: 1, kind: input, shape index: {}]
  %s2 = inlined_call_operand.hbm [shape: bf16[128,384], index: 2, kind: input, shape index: {}]
  %s3 = inlined_call_operand.hbm [shape: f32[1,384], index: 3, kind: input, shape index: {}]
  %s4 = inlined_call_operand.vmem [shape: f32[1,128], index: 4, kind: input, shape index: {}]
  %s5 = inlined_call_operand.vmem [shape: bf16[128,128], index: 5, kind: input, shape index: {}]
  %s6 = inlined_call_operand.vmem [shape: f32[1,128], index: 6, kind: input, shape index: {}]
  %s7 = inlined_call_operand.hbm [shape: f32[8,128], index: 7, kind: output, shape index: {}]
  %s8 = sld [smem:[#allocation0]]
  $region50: #{tpu_custom_call.1} parent=0
    _
  %s10 = ssub.s32 1, %s8
  %s11 = scalar_select 0, %s10, %s8
  $region1: #{tpu_custom_call.1} parent=0
    #allocation3 [shape = 'u8[24576]{0}', space=vmem, size = 0x6000, scoped, tag = 'input window, operand 1, single buffered']
    #allocation4 [shape = 's32[1]{0}', space=sflag, size = 0x4, scoped, tag = 'scoped memory for tpu_custom_call.1']
    #allocation5 [shape = 's32[1]{0}', space=sflag, size = 0x4, scoped, tag = 'scoped memory for tpu_custom_call.1']
    #allocation6 [shape = 'u8[98304]{0}', space=vmem, size = 0x18000, scoped, tag = 'input window, operand 2, single buffered']
    #allocation7 [shape = 's32[1]{0}', space=sflag, size = 0x4, scoped, tag = 'scoped memory for tpu_custom_call.1']
    #allocation8 [shape = 'u8[1536]{0}', space=vmem, size = 0x800, scoped, tag = 'input window, operand 3, single buffered']
    #allocation9 [shape = 'u8[4096]{0}', space=vmem, size = 0x1000, scoped, tag = 'output window, operand 0, single buffered']
    %12 = vsyncpa [#allocation4], 0
    %13 = vsyncpa [#allocation7], 0
    %14 = vsyncpa [#allocation5], 0
    // Predicated region
    $region2: #{tpu_custom_call.1} parent=1 // pred_check
      _
    $region3: #{tpu_custom_call.1} parent=1 // pred_check_branch
      %16 = sbr.rel (0) target = $region5
    $region4: #{tpu_custom_call.1} parent=1 // pred_region
      _
    $region5: #{tpu_custom_call.1} parent=1 // pred_fallthru
      _
    // Predicated region
    $region6: #{tpu_custom_call.1} parent=1 // pred_check
      _
    $region7: #{tpu_custom_call.1} parent=1 // pred_check_branch
      %18 = sbr.rel (0) target = $region9
    $region8: #{tpu_custom_call.1} parent=1 // pred_region
      %s20 = ssub.s32 768, 768
      %21 = vsyncadd [#allocation4], %s20
      %s22 = sshll.u32 [#allocation3], 4
      %s23 = int_to_ptr.vmem [resolvable:$true] %s22
      %28 = dma.hbm_to_vmem [thread:$0]  %s1, 768, %s23, [#allocation4], 192, 192, 12
    $region9: #{tpu_custom_call.1} parent=1 // pred_fallthru
      _
    // Predicated region
    $region10: #{tpu_custom_call.1} parent=1 // pred_check
      _
    $region11: #{tpu_custom_call.1} parent=1 // pred_check_branch
      %30 = sbr.rel (0) target = $region13
    $region12: #{tpu_custom_call.1} parent=1 // pred_region
      %s32 = ssub.s32 3072, 3072
      %33 = vsyncadd [#allocation7], %s32
      %s34 = sshll.u32 [#allocation6], 4
      %s35 = int_to_ptr.vmem [resolvable:$true] %s34
      %40 = dma.hbm_to_vmem [thread:$0]  %s2, 3072, %s35, [#allocation7], 192, 192, 12
    $region13: #{tpu_custom_call.1} parent=1 // pred_fallthru
      _
    // Predicated region
    $region14: #{tpu_custom_call.1} parent=1 // pred_check
      _
    $region15: #{tpu_custom_call.1} parent=1 // pred_check_branch
      %42 = sbr.rel (0) target = $region17
    $region16: #{tpu_custom_call.1} parent=1 // pred_region
      %s44 = ssub.s32 48, 48
      %45 = vsyncadd [#allocation7], %s44
      %s47 = sshll.u32 [#allocation8], 4
      %s48 = int_to_ptr.vmem [resolvable:$true] %s47
      %50 = dma.hbm_to_vmem [thread:$0]  %s3, 48, %s48, [#allocation7]
    $region17: #{tpu_custom_call.1} parent=1 // pred_fallthru
      _
    // Predicated region
    $region18: #{tpu_custom_call.1} parent=1 // pred_check
      _
    $region19: #{tpu_custom_call.1} parent=1 // pred_check_branch
      %52 = sbr.rel (0) target = $region21
    $region20: #{tpu_custom_call.1} parent=1 // pred_region
      _
    $region21: #{tpu_custom_call.1} parent=1 // pred_fallthru
      _
    // Predicated region
    $region22: #{tpu_custom_call.1} parent=1 // pred_check
      _
    $region23: #{tpu_custom_call.1} parent=1 // pred_check_branch
      %54 = sbr.rel (0) target = $region25
    $region24: #{tpu_custom_call.1} parent=1 // pred_region
      _
    $region25: #{tpu_custom_call.1} parent=1 // pred_fallthru
      _
    // Predicated region
    $region26: #{tpu_custom_call.1} parent=1 // pred_check
      _
    $region27: #{tpu_custom_call.1} parent=1 // pred_check_branch
      %56 = sbr.rel (0) target = $region29
    $region28: #{tpu_custom_call.1} parent=1 // pred_region
      _
    $region29: #{tpu_custom_call.1} parent=1 // pred_fallthru
      _
    // Predicated region
    $region30: #{tpu_custom_call.1} parent=1 // pred_check
      _
    $region31: #{tpu_custom_call.1} parent=1 // pred_check_branch
      %58 = sbr.rel (0) target = $region33
    $region32: #{tpu_custom_call.1} parent=1 // pred_region
      %59 = dma.done [#allocation4], 768
    $region33: #{tpu_custom_call.1} parent=1 // pred_fallthru
      _
    // Predicated region
    $region34: #{tpu_custom_call.1} parent=1 // pred_check
      _
    $region35: #{tpu_custom_call.1} parent=1 // pred_check_branch
      %61 = sbr.rel (0) target = $region37
    $region36: #{tpu_custom_call.1} parent=1 // pred_region
      %62 = dma.done [#allocation7], 3072
    $region37: #{tpu_custom_call.1} parent=1 // pred_fallthru
      _
    // Predicated region
    $region38: #{tpu_custom_call.1} parent=1 // pred_check
      _
    $region39: #{tpu_custom_call.1} parent=1 // pred_check_branch
      %64 = sbr.rel (0) target = $region41
    $region40: #{tpu_custom_call.1} parent=1 // pred_region
      %65 = dma.done [#allocation7], 48
    $region41: #{tpu_custom_call.1} parent=1 // pred_fallthru
      _
    %v67 = vld [vmem:[%s0] sm:$0xf]
    %v68 = vld [vmem:[%s0 + $0x4] sm:$0xf]
    %v69 = vld [vmem:[%s0 + $0x8] sm:$0xf]
    %v70 = vld [vmem:[%s0 + $0xc] sm:$0xf]
    %v71 = vld [vmem:[%s0 + $0x10] sm:$0xf]
    %v72 = vld [vmem:[%s0 + $0x14] sm:$0xf]
    %v73 = vld [vmem:[%s0 + $0x18] sm:$0xf]
    %v74 = vld [vmem:[%s0 + $0x1c] sm:$0xf]
    %v75 = vld [vmem:[#allocation3] sm:$0xff]
    %v76 = vld [vmem:[#allocation3 + $0x8] sm:$0xf]
    %v77 = vld [vmem:[#allocation3 + $0xc] sm:$0xff]
    %v78 = vld [vmem:[#allocation3 + $0x14] sm:$0xf]
    %v79 = vld [vmem:[#allocation3 + $0x18] sm:$0xff]
    %v80 = vld [vmem:[#allocation3 + $0x20] sm:$0xf]
    %v81 = vld [vmem:[#allocation3 + $0x24] sm:$0xff]
    %v82 = vld [vmem:[#allocation3 + $0x2c] sm:$0xf]
    %v83 = vld [vmem:[#allocation8] sm:$0x7]
    %v85 = vlaneseq
    %v86 = vshrl.u32 %v85, 7
    %v87 = vsub.s32 0, %v86
    %v88 = vrot.slane %v83, %v87
    %v89 = vlaneseq
    %v90 = vshrl.u32 %v89, 7
    %v91 = vsub.s32 1, %v90
    %v92 = vrot.slane %v83, %v91
    %v93 = vlaneseq
    %v94 = vshrl.u32 %v93, 7
    %v95 = vsub.s32 2, %v94
    %v96 = vrot.slane %v83, %v95
    %v108 = vunpack.c.l.b16 %v67
    %v109 = vunpack.c.l.b16 %v68
    %v110 = vunpack.c.l.b16 %v69
    %v111 = vunpack.c.l.b16 %v70
    %v112 = vunpack.c.l.b16 %v71
    %v113 = vunpack.c.l.b16 %v72
    %v114 = vunpack.c.l.b16 %v73
    %v115 = vunpack.c.l.b16 %v74
    %v116 = vpack.c.b16 %v109, %v108
    %v117 = vpack.c.b16 %v111, %v110
    %v118 = vpack.c.b16 %v113, %v112
    %v119 = vpack.c.b16 %v115, %v114
    %v128 = vunpack.c.l.b16 %v75
    %v129 = vunpack.c.h.b16 %v75
    %v130 = vunpack.c.l.b16 %v76
    %v131 = vunpack.c.l.b16 %v77
    %v132 = vunpack.c.h.b16 %v77
    %v133 = vunpack.c.l.b16 %v78
    %v134 = vunpack.c.l.b16 %v79
    %v135 = vunpack.c.h.b16 %v79
    %v136 = vunpack.c.l.b16 %v80
    %v137 = vunpack.c.l.b16 %v81
    %v138 = vunpack.c.h.b16 %v81
    %v139 = vunpack.c.l.b16 %v82
    %v140 = vpack.c.b16 %v131, %v128
    %v141 = vpack.c.b16 %v132, %v129
    %v142 = vpack.c.b16 %v133, %v130
    %v143 = vpack.c.b16 %v137, %v134
    %v144 = vpack.c.b16 %v138, %v135
    %v145 = vpack.c.b16 %v139, %v136
    %vm152 = vcmask 261120
    %v154 = vsel %vm152, %v116, 0
    %v157 = vsel %vm152, %v117, 0
    %v160 = vsel %vm152, %v118, 0
    %v163 = vsel %vm152, %v119, 0
    %165 = vmatprep.subr.bf16.mxu0 %v141
    %166 = vmatpush1.bf16.msra.mxu0 %v140
    %167 = vmatprep.subr.bf16.mxu0 %v144
    %168 = vmatpush1.bf16.msra.mxu0 %v143
    %169 = vmatprep.subr.bf16.mxu0 0
    %170 = vmatpush1.bf16.msra.mxu0 0
    %171 = vmatprep.subr.bf16.mxu0 0
    %172 = vmatpush1.bf16.msra.mxu0 0
    %173 = vmatprep.subr.bf16.mxu0 0
    %174 = vmatpush1.bf16.msra.mxu0 0
    %175 = vmatprep.subr.bf16.mxu0 0
    %176 = vmatpush1.bf16.msra.mxu0 0
    %177 = vmatprep.subr.bf16.mxu0 0
    %178 = vmatpush1.bf16.msra.mxu0 0
    %179 = vmatprep.subr.bf16.mxu0 0
    %180 = vmatpush1.bf16.msra.mxu0 0
    %181 = vmatprep.subr.bf16.mxu0 0
    %182 = vmatpush1.bf16.msra.mxu0 0
    %183 = vmatprep.subr.bf16.mxu0 0
    %184 = vmatpush1.bf16.msra.mxu0 0
    %185 = vmatprep.subr.bf16.mxu0 0
    %186 = vmatpush1.bf16.msra.mxu0 0
    %187 = vmatprep.subr.bf16.mxu0 0
    %188 = vmatpush1.bf16.msra.mxu0 0
    %189 = vmatprep.subr.bf16.mxu0 0
    %190 = vmatpush1.bf16.msra.mxu0 0
    %191 = vmatprep.subr.bf16.mxu0 0
    %192 = vmatpush1.bf16.msra.mxu0 0
    %193 = vmatprep.subr.bf16.mxu0 0
    %194 = vmatpush1.bf16.msra.mxu0 0
    %195 = vmatprep.subr.bf16.mxu0 0
    %196 = vmatpush1.bf16.msra.mxu0 0
    %197 = vmatprep.mubr.bf16.mxu0 0
    %198 = vmatmul.mubr.bf16.gmra.mrb[0].mxu0 %v154
    %v199 = vpop.f32.mrb[0].mxu0
    %v200 = vadd.f32 %v88, %v199
    %v201 = vpop.f32.mrb[0].mxu0
    %v202 = vadd.f32 %v92, %v201
    %v203 = vpop.f32.mrb[0].mxu0
    %v204 = vadd.f32 %v88, %v203
    %v205 = vpop.f32.mrb[0].mxu0
    %v206 = vadd.f32 %v92, %v205
    %207 = vmatprep.mubr.bf16.mxu0 0
    %208 = vmatmul.mubr.bf16.gmra.mrb[0].mxu0 %v157
    %v209 = vpop.f32.mrb[0].mxu0
    %v210 = vadd.f32 %v88, %v209
    %v211 = vpop.f32.mrb[0].mxu0
    %v212 = vadd.f32 %v92, %v211
    %v213 = vpop.f32.mrb[0].mxu0
    %v214 = vadd.f32 %v88, %v213
    %v215 = vpop.f32.mrb[0].mxu0
    %v216 = vadd.f32 %v92, %v215
    %217 = vmatprep.mubr.bf16.mxu0 0
    %218 = vmatmul.mubr.bf16.gmra.mrb[0].mxu0 %v160
    %v219 = vpop.f32.mrb[0].mxu0
    %v220 = vadd.f32 %v88, %v219
    %v221 = vpop.f32.mrb[0].mxu0
    %v222 = vadd.f32 %v92, %v221
    %v223 = vpop.f32.mrb[0].mxu0
    %v224 = vadd.f32 %v88, %v223
    %v225 = vpop.f32.mrb[0].mxu0
    %v226 = vadd.f32 %v92, %v225
    %227 = vmatprep.mubr.bf16.mxu0 0
    %228 = vmatmul.mubr.bf16.gmra.mrb[0].mxu0 %v163
    %v229 = vpop.f32.mrb[0].mxu0
    %v230 = vadd.f32 %v88, %v229
    %v231 = vpop.f32.mrb[0].mxu0
    %v232 = vadd.f32 %v92, %v231
    %v233 = vpop.f32.mrb[0].mxu0
    %v234 = vadd.f32 %v88, %v233
    %v235 = vpop.f32.mrb[0].mxu0
    %v236 = vadd.f32 %v92, %v235
    %237 = vdwg.mxu0
    %238 = vmatprep.subr.bf16.mxu0 0
    %239 = vmatpush1.bf16.msra.mxu0 %v142
    %240 = vmatprep.subr.bf16.mxu0 0
    %241 = vmatpush1.bf16.msra.mxu0 %v145
    %242 = vmatprep.subr.bf16.mxu0 0
    %243 = vmatpush1.bf16.msra.mxu0 0
    %244 = vmatprep.subr.bf16.mxu0 0
    %245 = vmatpush1.bf16.msra.mxu0 0
    %246 = vmatprep.subr.bf16.mxu0 0
    %247 = vmatpush1.bf16.msra.mxu0 0
    %248 = vmatprep.subr.bf16.mxu0 0
    %249 = vmatpush1.bf16.msra.mxu0 0
    %250 = vmatprep.subr.bf16.mxu0 0
    %251 = vmatpush1.bf16.msra.mxu0 0
    %252 = vmatprep.subr.bf16.mxu0 0
    %253 = vmatpush1.bf16.msra.mxu0 0
    %254 = vmatprep.subr.bf16.mxu0 0
    %255 = vmatpush1.bf16.msra.mxu0 0
    %256 = vmatprep.subr.bf16.mxu0 0
    %257 = vmatpush1.bf16.msra.mxu0 0
    %258 = vmatprep.subr.bf16.mxu0 0
    %259 = vmatpush1.bf16.msra.mxu0 0
    %260 = vmatprep.subr.bf16.mxu0 0
    %261 = vmatpush1.bf16.msra.mxu0 0
    %262 = vmatprep.subr.bf16.mxu0 0
    %263 = vmatpush1.bf16.msra.mxu0 0
    %264 = vmatprep.subr.bf16.mxu0 0
    %265 = vmatpush1.bf16.msra.mxu0 0
    %266 = vmatprep.subr.bf16.mxu0 0
    %267 = vmatpush1.bf16.msra.mxu0 0
    %268 = vmatprep.subr.bf16.mxu0 0
    %269 = vmatpush1.bf16.msra.mxu0 0
    %270 = vmatprep.mubr.bf16.mxu0 0
    %271 = vmatmul.mubr.bf16.gmra.mrb[0].mxu0 %v154
    %v272 = vpop.f32.mrb[0].mxu0
    %v273 = vadd.f32 %v96, %v272
    %v274 = vpop.f32.mrb[0].mxu0
    %v275 = vpop.f32.mrb[0].mxu0
    %v276 = vadd.f32 %v96, %v275
    %v277 = vpop.f32.mrb[0].mxu0
    %278 = vmatprep.mubr.bf16.mxu0 0
    %279 = vmatmul.mubr.bf16.gmra.mrb[0].mxu0 %v157
    %v280 = vpop.f32.mrb[0].mxu0
    %v281 = vadd.f32 %v96, %v280
    %v282 = vpop.f32.mrb[0].mxu0
    %v283 = vpop.f32.mrb[0].mxu0
    %v284 = vadd.f32 %v96, %v283
    %v285 = vpop.f32.mrb[0].mxu0
    %286 = vmatprep.mubr.bf16.mxu0 0
    %287 = vmatmul.mubr.bf16.gmra.mrb[0].mxu0 %v160
    %v288 = vpop.f32.mrb[0].mxu0
    %v289 = vadd.f32 %v96, %v288
    %v290 = vpop.f32.mrb[0].mxu0
    %v291 = vpop.f32.mrb[0].mxu0
    %v292 = vadd.f32 %v96, %v291
    %v293 = vpop.f32.mrb[0].mxu0
    %294 = vmatprep.mubr.bf16.mxu0 0
    %295 = vmatmul.mubr.bf16.gmra.mrb[0].mxu0 %v163
    %v296 = vpop.f32.mrb[0].mxu0
    %v297 = vadd.f32 %v96, %v296
    %v298 = vpop.f32.mrb[0].mxu0
    %v299 = vpop.f32.mrb[0].mxu0
    %v300 = vadd.f32 %v96, %v299
    %v301 = vpop.f32.mrb[0].mxu0
    %302 = vdwg.mxu0
    %303 = vst [vmem:[#allocation2] sm:$0xff] %v200
    %304 = vst [vmem:[#allocation2 + $0x8] sm:$0xff] %v202
    %305 = vst [vmem:[#allocation2 + $0x10] sm:$0xff] %v273
    %306 = vst [vmem:[#allocation2 + $0x18] sm:$0xff] %v204
    %307 = vst [vmem:[#allocation2 + $0x20] sm:$0xff] %v206
    %308 = vst [vmem:[#allocation2 + $0x28] sm:$0xff] %v276
    %309 = vst [vmem:[#allocation2 + $0x30] sm:$0xff] %v210
    %310 = vst [vmem:[#allocation2 + $0x38] sm:$0xff] %v212
    %311 = vst [vmem:[#allocation2 + $0x40] sm:$0xff] %v281
    %312 = vst [vmem:[#allocation2 + $0x48] sm:$0xff] %v214
    %313 = vst [vmem:[#allocation2 + $0x50] sm:$0xff] %v216
    %314 = vst [vmem:[#allocation2 + $0x58] sm:$0xff] %v284
    %315 = vst [vmem:[#allocation2 + $0x60] sm:$0xff] %v220
    %316 = vst [vmem:[#allocation2 + $0x68] sm:$0xff] %v222
    %317 = vst [vmem:[#allocation2 + $0x70] sm:$0xff] %v289
    %318 = vst [vmem:[#allocation2 + $0x78] sm:$0xff] %v224
    %319 = vst [vmem:[#allocation2 + $0x80] sm:$0xff] %v226
    %320 = vst [vmem:[#allocation2 + $0x88] sm:$0xff] %v292
    %321 = vst [vmem:[#allocation2 + $0x90] sm:$0xff] %v230
    %322 = vst [vmem:[#allocation2 + $0x98] sm:$0xff] %v232
    %323 = vst [vmem:[#allocation2 + $0xa0] sm:$0xff] %v297
    %324 = vst [vmem:[#allocation2 + $0xa8] sm:$0xff] %v234
    %325 = vst [vmem:[#allocation2 + $0xb0] sm:$0xff] %v236
    %326 = vst [vmem:[#allocation2 + $0xb8] sm:$0xff] %v300
    %v327 = vld [vmem:[%s4] sm:$0x1]
    %v329 = vlaneseq
    %v330 = vshrl.u32 %v329, 7
    %v331 = vsub.s32 0, %v330
    %v332 = vrot.slane %v327, %v331
    %v334 = vld [vmem:[#allocation6] sm:$0xff]
    %v335 = vld [vmem:[#allocation6 + $0x8] sm:$0xf]
    %v336 = vld [vmem:[#allocation6 + $0xc] sm:$0xff]
    %v337 = vld [vmem:[#allocation6 + $0x14] sm:$0xf]
    %v338 = vld [vmem:[#allocation6 + $0x18] sm:$0xff]
    %v339 = vld [vmem:[#allocation6 + $0x20] sm:$0xf]
    %v340 = vld [vmem:[#allocation6 + $0x24] sm:$0xff]
    %v341 = vld [vmem:[#allocation6 + $0x2c] sm:$0xf]
    %v342 = vld [vmem:[#allocation6 + $0x30] sm:$0xff]
    %v343 = vld [vmem:[#allocation6 + $0x38] sm:$0xf]
    %v344 = vld [vmem:[#allocation6 + $0x3c] sm:$0xff]
    %v345 = vld [vmem:[#allocation6 + $0x44] sm:$0xf]
    %v346 = vld [vmem:[#allocation6 + $0x48] sm:$0xff]
    %v347 = vld [vmem:[#allocation6 + $0x50] sm:$0xf]
    %v348 = vld [vmem:[#allocation6 + $0x54] sm:$0xff]
    %v349 = vld [vmem:[#allocation6 + $0x5c] sm:$0xf]
    %v350 = vld [vmem:[#allocation6 + $0x60] sm:$0xff]
    %v351 = vld [vmem:[#allocation6 + $0x68] sm:$0xf]
    %v352 = vld [vmem:[#allocation6 + $0x6c] sm:$0xff]
    %v353 = vld [vmem:[#allocation6 + $0x74] sm:$0xf]
    %v354 = vld [vmem:[#allocation6 + $0x78] sm:$0xff]
    %v355 = vld [vmem:[#allocation6 + $0x80] sm:$0xf]
    %v356 = vld [vmem:[#allocation6 + $0x84] sm:$0xff]
    %v357 = vld [vmem:[#allocation6 + $0x8c] sm:$0xf]
    %v358 = vld [vmem:[#allocation6 + $0x90] sm:$0xff]
    %v359 = vld [vmem:[#allocation6 + $0x98] sm:$0xf]
    %v360 = vld [vmem:[#allocation6 + $0x9c] sm:$0xff]
    %v361 = vld [vmem:[#allocation6 + $0xa4] sm:$0xf]
    %v362 = vld [vmem:[#allocation6 + $0xa8] sm:$0xff]
    %v363 = vld [vmem:[#allocation6 + $0xb0] sm:$0xf]
    %v364 = vld [vmem:[#allocation6 + $0xb4] sm:$0xff]
    %v365 = vld [vmem:[#allocation6 + $0xbc] sm:$0xf]
    %v366 = vld [vmem:[#allocation2] sm:$0xff]
    %v367 = vld [vmem:[#allocation2 + $0x8] sm:$0xff]
    %v368 = vld [vmem:[#allocation2 + $0x10] sm:$0xff]
    %v401 = vunpack.c.l.b16 %v334
    %v402 = vunpack.c.h.b16 %v334
    %v403 = vunpack.c.l.b16 %v335
    %v404 = vunpack.c.l.b16 %v336
    %v405 = vunpack.c.h.b16 %v336
    %v406 = vunpack.c.l.b16 %v337
    %v407 = vunpack.c.l.b16 %v338
    %v408 = vunpack.c.h.b16 %v338
    %v409 = vunpack.c.l.b16 %v339
    %v410 = vunpack.c.l.b16 %v340
    %v411 = vunpack.c.h.b16 %v340
    %v412 = vunpack.c.l.b16 %v341
    %v413 = vunpack.c.l.b16 %v342
    %v414 = vunpack.c.h.b16 %v342
    %v415 = vunpack.c.l.b16 %v343
    %v416 = vunpack.c.l.b16 %v344
    %v417 = vunpack.c.h.b16 %v344
    %v418 = vunpack.c.l.b16 %v345
    %v419 = vunpack.c.l.b16 %v346
    %v420 = vunpack.c.h.b16 %v346
    %v421 = vunpack.c.l.b16 %v347
    %v422 = vunpack.c.l.b16 %v348
    %v423 = vunpack.c.h.b16 %v348
    %v424 = vunpack.c.l.b16 %v349
    %v425 = vunpack.c.l.b16 %v350
    %v426 = vunpack.c.h.b16 %v350
    %v427 = vunpack.c.l.b16 %v351
    %v428 = vunpack.c.l.b16 %v352
    %v429 = vunpack.c.h.b16 %v352
    %v430 = vunpack.c.l.b16 %v353
    %v431 = vunpack.c.l.b16 %v354
    %v432 = vunpack.c.h.b16 %v354
    %v433 = vunpack.c.l.b16 %v355
    %v434 = vunpack.c.l.b16 %v356
    %v435 = vunpack.c.h.b16 %v356
    %v436 = vunpack.c.l.b16 %v357
    %v437 = vunpack.c.l.b16 %v358
    %v438 = vunpack.c.h.b16 %v358
    %v439 = vunpack.c.l.b16 %v359
    %v440 = vunpack.c.l.b16 %v360
    %v441 = vunpack.c.h.b16 %v360
    %v442 = vunpack.c.l.b16 %v361
    %v443 = vunpack.c.l.b16 %v362
    %v444 = vunpack.c.h.b16 %v362
    %v445 = vunpack.c.l.b16 %v363
    %v446 = vunpack.c.l.b16 %v364
    %v447 = vunpack.c.h.b16 %v364
    %v448 = vunpack.c.l.b16 %v365
    %v449 = vpack.c.b16 %v404, %v401
    %v450 = vpack.c.b16 %v405, %v402
    %v451 = vpack.c.b16 %v406, %v403
    %v452 = vpack.c.b16 %v410, %v407
    %v453 = vpack.c.b16 %v411, %v408
    %v454 = vpack.c.b16 %v412, %v409
    %v455 = vpack.c.b16 %v416, %v413
    %v456 = vpack.c.b16 %v417, %v414
    %v457 = vpack.c.b16 %v418, %v415
    %v458 = vpack.c.b16 %v422, %v419
    %v459 = vpack.c.b16 %v423, %v420
    %v460 = vpack.c.b16 %v424, %v421
    %v461 = vpack.c.b16 %v428, %v425
    %v462 = vpack.c.b16 %v429, %v426
    %v463 = vpack.c.b16 %v430, %v427
    %v464 = vpack.c.b16 %v434, %v431
    %v465 = vpack.c.b16 %v435, %v432
    %v466 = vpack.c.b16 %v436, %v433
    %v467 = vpack.c.b16 %v440, %v437
    %v468 = vpack.c.b16 %v441, %v438
    %v469 = vpack.c.b16 %v442, %v439
    %v470 = vpack.c.b16 %v446, %v443
    %v471 = vpack.c.b16 %v447, %v444
    %v472 = vpack.c.b16 %v448, %v445
    %497 = vmatprep.subr.bf16.mxu0 %v450
    %498 = vmatpush1.bf16.msra.mxu0 %v449
    %499 = vmatprep.subr.bf16.mxu0 %v453
    %500 = vmatpush1.bf16.msra.mxu0 %v452
    %501 = vmatprep.subr.bf16.mxu0 %v456
    %502 = vmatpush1.bf16.msra.mxu0 %v455
    %503 = vmatprep.subr.bf16.mxu0 %v459
    %504 = vmatpush1.bf16.msra.mxu0 %v458
    %505 = vmatprep.subr.bf16.mxu0 %v462
    %506 = vmatpush1.bf16.msra.mxu0 %v461
    %507 = vmatprep.subr.bf16.mxu0 %v465
    %508 = vmatpush1.bf16.msra.mxu0 %v464
    %509 = vmatprep.subr.bf16.mxu0 %v468
    %510 = vmatpush1.bf16.msra.mxu0 %v467
    %511 = vmatprep.subr.bf16.mxu0 %v471
    %512 = vmatpush1.bf16.msra.mxu0 %v470
    %513 = vmatprep.subr.bf16.mxu0 0
    %514 = vmatpush1.bf16.msra.mxu0 0
    %515 = vmatprep.subr.bf16.mxu0 0
    %516 = vmatpush1.bf16.msra.mxu0 0
    %517 = vmatprep.subr.bf16.mxu0 0
    %518 = vmatpush1.bf16.msra.mxu0 0
    %519 = vmatprep.subr.bf16.mxu0 0
    %520 = vmatpush1.bf16.msra.mxu0 0
    %521 = vmatprep.subr.bf16.mxu0 0
    %522 = vmatpush1.bf16.msra.mxu0 0
    %523 = vmatprep.subr.bf16.mxu0 0
    %524 = vmatpush1.bf16.msra.mxu0 0
    %525 = vmatprep.subr.bf16.mxu0 0
    %526 = vmatpush1.bf16.msra.mxu0 0
    %527 = vmatprep.subr.bf16.mxu0 0
    %528 = vmatpush1.bf16.msra.mxu0 0
    %529 = vmatprep.mubr.bf16.mxu0 0
    %530 = vmatmul.mubr.bf16.gmra.mrb[0].mxu0 0
    %v531 = vpop.f32.mrb[0].mxu0
    %v532 = vadd.f32 0.0, %v531
    %v533 = vpop.f32.mrb[0].mxu0
    %v534 = vadd.f32 0.0, %v533
    %v535 = vpop.f32.mrb[0].mxu0
    %v536 = vpop.f32.mrb[0].mxu0
    %537 = vdwg.mxu0
    %538 = vmatprep.subr.bf16.mxu0 0
    %539 = vmatpush1.bf16.msra.mxu0 %v451
    %540 = vmatprep.subr.bf16.mxu0 0
    %541 = vmatpush1.bf16.msra.mxu0 %v454
    %542 = vmatprep.subr.bf16.mxu0 0
    %543 = vmatpush1.bf16.msra.mxu0 %v457
    %544 = vmatprep.subr.bf16.mxu0 0
    %545 = vmatpush1.bf16.msra.mxu0 %v460
    %546 = vmatprep.subr.bf16.mxu0 0
    %547 = vmatpush1.bf16.msra.mxu0 %v463
    %548 = vmatprep.subr.bf16.mxu0 0
    %549 = vmatpush1.bf16.msra.mxu0 %v466
    %550 = vmatprep.subr.bf16.mxu0 0
    %551 = vmatpush1.bf16.msra.mxu0 %v469
    %552 = vmatprep.subr.bf16.mxu0 0
    %553 = vmatpush1.bf16.msra.mxu0 %v472
    %554 = vmatprep.subr.bf16.mxu0 0
    %555 = vmatpush1.bf16.msra.mxu0 0
    %556 = vmatprep.subr.bf16.mxu0 0
    %557 = vmatpush1.bf16.msra.mxu0 0
    %558 = vmatprep.subr.bf16.mxu0 0
    %559 = vmatpush1.bf16.msra.mxu0 0
    %560 = vmatprep.subr.bf16.mxu0 0
    %561 = vmatpush1.bf16.msra.mxu0 0
    %562 = vmatprep.subr.bf16.mxu0 0
    %563 = vmatpush1.bf16.msra.mxu0 0
    %564 = vmatprep.subr.bf16.mxu0 0
    %565 = vmatpush1.bf16.msra.mxu0 0
    %566 = vmatprep.subr.bf16.mxu0 0
    %567 = vmatpush1.bf16.msra.mxu0 0
    %568 = vmatprep.subr.bf16.mxu0 0
    %569 = vmatpush1.bf16.msra.mxu0 0
    %570 = vmatprep.mubr.bf16.mxu0 0
    %571 = vmatmul.mubr.bf16.gmra.mrb[0].mxu0 0
    %v572 = vpop.f32.mrb[0].mxu0
    %v573 = vadd.f32 0.0, %v572
    %v574 = vpop.f32.mrb[0].mxu0
    %v575 = vpop.f32.mrb[0].mxu0
    %v576 = vpop.f32.mrb[0].mxu0
    %577 = vdwg.mxu0
    %v578 = vadd.f32 %v366, %v532
    %v579 = vxor.u32 %v578, 2147483648
    %v580 = vmul.f32 %v579, 1.442695
    %v581 = vpow.pop %v580
    %v582 = vadd.f32 %v581, 1.0
    %v583 = vrcp.pop %v582
    %v584 = vmul.f32 1.0, %v583
    %v585 = vadd.f32 %v367, %v534
    %v586 = vxor.u32 %v585, 2147483648
    %v587 = vmul.f32 %v586, 1.442695
    %v588 = vpow.pop %v587
    %v589 = vadd.f32 %v588, 1.0
    %v590 = vrcp.pop %v589
    %v591 = vmul.f32 1.0, %v590
    %v592 = vadd.f32 %v573, %v332
    %v593 = vmul.f32 %v584, %v592
    %v594 = vadd.f32 %v368, %v593
    %v595 = vtanh.pop %v594
    %v596 = vsub.f32 1.0, %v591
    %v597 = vmul.f32 %v596, %v595
    %v598 = vmul.f32 %v591, 0.0
    %v599 = vadd.f32 %v597, %v598
    %s600 = scalar_lea.vmem [#allocation2], 24
    %v601 = vld [vmem:[%s600] sm:$0xff]
    %v602 = vld [vmem:[%s600 + $0x8] sm:$0xff]
    %v603 = vld [vmem:[%s600 + $0x10] sm:$0xff]
    %v604 = vpack.c.bf16 %v599, %v599
    %605 = vmatprep.subr.bf16.mxu0 %v450
    %606 = vmatpush1.bf16.msra.mxu0 %v449
    %607 = vmatprep.subr.bf16.mxu0 %v453
    %608 = vmatpush1.bf16.msra.mxu0 %v452
    %609 = vmatprep.subr.bf16.mxu0 %v456
    %610 = vmatpush1.bf16.msra.mxu0 %v455
    %611 = vmatprep.subr.bf16.mxu0 %v459
    %612 = vmatpush1.bf16.msra.mxu0 %v458
    %613 = vmatprep.subr.bf16.mxu0 %v462
    %614 = vmatpush1.bf16.msra.mxu0 %v461
    %615 = vmatprep.subr.bf16.mxu0 %v465
    %616 = vmatpush1.bf16.msra.mxu0 %v464
    %617 = vmatprep.subr.bf16.mxu0 %v468
    %618 = vmatpush1.bf16.msra.mxu0 %v467
    %619 = vmatprep.subr.bf16.mxu0 %v471
    %620 = vmatpush1.bf16.msra.mxu0 %v470
    %621 = vmatprep.subr.bf16.mxu0 0
    %622 = vmatpush1.bf16.msra.mxu0 0
    %623 = vmatprep.subr.bf16.mxu0 0
    %624 = vmatpush1.bf16.msra.mxu0 0
    %625 = vmatprep.subr.bf16.mxu0 0
    %626 = vmatpush1.bf16.msra.mxu0 0
    %627 = vmatprep.subr.bf16.mxu0 0
    %628 = vmatpush1.bf16.msra.mxu0 0
    %629 = vmatprep.subr.bf16.mxu0 0
    %630 = vmatpush1.bf16.msra.mxu0 0
    %631 = vmatprep.subr.bf16.mxu0 0
    %632 = vmatpush1.bf16.msra.mxu0 0
    %633 = vmatprep.subr.bf16.mxu0 0
    %634 = vmatpush1.bf16.msra.mxu0 0
    %635 = vmatprep.subr.bf16.mxu0 0
    %636 = vmatpush1.bf16.msra.mxu0 0
    %637 = vmatprep.mubr.bf16.mxu0 0
    %638 = vmatmul.mubr.bf16.gmra.mrb[0].mxu0 %v604
    %v639 = vpop.f32.mrb[0].mxu0
    %v640 = vadd.f32 0.0, %v639
    %v641 = vpop.f32.mrb[0].mxu0
    %v642 = vadd.f32 0.0, %v641
    %v643 = vpop.f32.mrb[0].mxu0
    %v644 = vpop.f32.mrb[0].mxu0
    %645 = vdwg.mxu0
    %646 = vmatprep.subr.bf16.mxu0 0
    %647 = vmatpush1.bf16.msra.mxu0 %v451
    %648 = vmatprep.subr.bf16.mxu0 0
    %649 = vmatpush1.bf16.msra.mxu0 %v454
    %650 = vmatprep.subr.bf16.mxu0 0
    %651 = vmatpush1.bf16.msra.mxu0 %v457
    %652 = vmatprep.subr.bf16.mxu0 0
    %653 = vmatpush1.bf16.msra.mxu0 %v460
    %654 = vmatprep.subr.bf16.mxu0 0
    %655 = vmatpush1.bf16.msra.mxu0 %v463
    %656 = vmatprep.subr.bf16.mxu0 0
    %657 = vmatpush1.bf16.msra.mxu0 %v466
    %658 = vmatprep.subr.bf16.mxu0 0
    %659 = vmatpush1.bf16.msra.mxu0 %v469
    %660 = vmatprep.subr.bf16.mxu0 0
    %661 = vmatpush1.bf16.msra.mxu0 %v472
    %662 = vmatprep.subr.bf16.mxu0 0
    %663 = vmatpush1.bf16.msra.mxu0 0
    %664 = vmatprep.subr.bf16.mxu0 0
    %665 = vmatpush1.bf16.msra.mxu0 0
    %666 = vmatprep.subr.bf16.mxu0 0
    %667 = vmatpush1.bf16.msra.mxu0 0
    %668 = vmatprep.subr.bf16.mxu0 0
    %669 = vmatpush1.bf16.msra.mxu0 0
    %670 = vmatprep.subr.bf16.mxu0 0
    %671 = vmatpush1.bf16.msra.mxu0 0
    %672 = vmatprep.subr.bf16.mxu0 0
    %673 = vmatpush1.bf16.msra.mxu0 0
    %674 = vmatprep.subr.bf16.mxu0 0
    %675 = vmatpush1.bf16.msra.mxu0 0
    %676 = vmatprep.subr.bf16.mxu0 0
    %677 = vmatpush1.bf16.msra.mxu0 0
    %678 = vmatprep.mubr.bf16.mxu0 0
    %679 = vmatmul.mubr.bf16.gmra.mrb[0].mxu0 %v604
    %v680 = vpop.f32.mrb[0].mxu0
    %v681 = vadd.f32 0.0, %v680
    %v682 = vpop.f32.mrb[0].mxu0
    %v683 = vpop.f32.mrb[0].mxu0
    %v684 = vpop.f32.mrb[0].mxu0
    %685 = vdwg.mxu0
    %v686 = vadd.f32 %v601, %v640
    %v687 = vxor.u32 %v686, 2147483648
    %v688 = vmul.f32 %v687, 1.442695
    %v689 = vpow.pop %v688
    %v690 = vadd.f32 %v689, 1.0
    %v691 = vrcp.pop %v690
    %v692 = vmul.f32 1.0, %v691
    %v693 = vadd.f32 %v602, %v642
    %v694 = vxor.u32 %v693, 2147483648
    %v695 = vmul.f32 %v694, 1.442695
    %v696 = vpow.pop %v695
    %v697 = vadd.f32 %v696, 1.0
    %v698 = vrcp.pop %v697
    %v699 = vmul.f32 1.0, %v698
    %v700 = vadd.f32 %v681, %v332
    %v701 = vmul.f32 %v692, %v700
    %v702 = vadd.f32 %v603, %v701
    %v703 = vtanh.pop %v702
    %v704 = vsub.f32 1.0, %v699
    %v705 = vmul.f32 %v704, %v703
    %v706 = vmul.f32 %v699, %v599
    %v707 = vadd.f32 %v705, %v706
    %s708 = scalar_lea.vmem [#allocation2], 48
    %v709 = vld [vmem:[%s708] sm:$0xff]
    %v710 = vld [vmem:[%s708 + $0x8] sm:$0xff]
    %v711 = vld [vmem:[%s708 + $0x10] sm:$0xff]
    %v712 = vpack.c.bf16 %v707, %v707
    %713 = vmatprep.subr.bf16.mxu0 %v450
    %714 = vmatpush1.bf16.msra.mxu0 %v449
    %715 = vmatprep.subr.bf16.mxu0 %v453
    %716 = vmatpush1.bf16.msra.mxu0 %v452
    %717 = vmatprep.subr.bf16.mxu0 %v456
    %718 = vmatpush1.bf16.msra.mxu0 %v455
    %719 = vmatprep.subr.bf16.mxu0 %v459
    %720 = vmatpush1.bf16.msra.mxu0 %v458
    %721 = vmatprep.subr.bf16.mxu0 %v462
    %722 = vmatpush1.bf16.msra.mxu0 %v461
    %723 = vmatprep.subr.bf16.mxu0 %v465
    %724 = vmatpush1.bf16.msra.mxu0 %v464
    %725 = vmatprep.subr.bf16.mxu0 %v468
    %726 = vmatpush1.bf16.msra.mxu0 %v467
    %727 = vmatprep.subr.bf16.mxu0 %v471
    %728 = vmatpush1.bf16.msra.mxu0 %v470
    %729 = vmatprep.subr.bf16.mxu0 0
    %730 = vmatpush1.bf16.msra.mxu0 0
    %731 = vmatprep.subr.bf16.mxu0 0
    %732 = vmatpush1.bf16.msra.mxu0 0
    %733 = vmatprep.subr.bf16.mxu0 0
    %734 = vmatpush1.bf16.msra.mxu0 0
    %735 = vmatprep.subr.bf16.mxu0 0
    %736 = vmatpush1.bf16.msra.mxu0 0
    %737 = vmatprep.subr.bf16.mxu0 0
    %738 = vmatpush1.bf16.msra.mxu0 0
    %739 = vmatprep.subr.bf16.mxu0 0
    %740 = vmatpush1.bf16.msra.mxu0 0
    %741 = vmatprep.subr.bf16.mxu0 0
    %742 = vmatpush1.bf16.msra.mxu0 0
    %743 = vmatprep.subr.bf16.mxu0 0
    %744 = vmatpush1.bf16.msra.mxu0 0
    %745 = vmatprep.mubr.bf16.mxu0 0
    %746 = vmatmul.mubr.bf16.gmra.mrb[0].mxu0 %v712
    %v747 = vpop.f32.mrb[0].mxu0
    %v748 = vadd.f32 0.0, %v747
    %v749 = vpop.f32.mrb[0].mxu0
    %v750 = vadd.f32 0.0, %v749
    %v751 = vpop.f32.mrb[0].mxu0
    %v752 = vpop.f32.mrb[0].mxu0
    %753 = vdwg.mxu0
    %754 = vmatprep.subr.bf16.mxu0 0
    %755 = vmatpush1.bf16.msra.mxu0 %v451
    %756 = vmatprep.subr.bf16.mxu0 0
    %757 = vmatpush1.bf16.msra.mxu0 %v454
    %758 = vmatprep.subr.bf16.mxu0 0
    %759 = vmatpush1.bf16.msra.mxu0 %v457
    %760 = vmatprep.subr.bf16.mxu0 0
    %761 = vmatpush1.bf16.msra.mxu0 %v460
    %762 = vmatprep.subr.bf16.mxu0 0
    %763 = vmatpush1.bf16.msra.mxu0 %v463
    %764 = vmatprep.subr.bf16.mxu0 0
    %765 = vmatpush1.bf16.msra.mxu0 %v466
    %766 = vmatprep.subr.bf16.mxu0 0
    %767 = vmatpush1.bf16.msra.mxu0 %v469
    %768 = vmatprep.subr.bf16.mxu0 0
    %769 = vmatpush1.bf16.msra.mxu0 %v472
    %770 = vmatprep.subr.bf16.mxu0 0
    %771 = vmatpush1.bf16.msra.mxu0 0
    %772 = vmatprep.subr.bf16.mxu0 0
    %773 = vmatpush1.bf16.msra.mxu0 0
    %774 = vmatprep.subr.bf16.mxu0 0
    %775 = vmatpush1.bf16.msra.mxu0 0
    %776 = vmatprep.subr.bf16.mxu0 0
    %777 = vmatpush1.bf16.msra.mxu0 0
    %778 = vmatprep.subr.bf16.mxu0 0
    %779 = vmatpush1.bf16.msra.mxu0 0
    %780 = vmatprep.subr.bf16.mxu0 0
    %781 = vmatpush1.bf16.msra.mxu0 0
    %782 = vmatprep.subr.bf16.mxu0 0
    %783 = vmatpush1.bf16.msra.mxu0 0
    %784 = vmatprep.subr.bf16.mxu0 0
    %785 = vmatpush1.bf16.msra.mxu0 0
    %786 = vmatprep.mubr.bf16.mxu0 0
    %787 = vmatmul.mubr.bf16.gmra.mrb[0].mxu0 %v712
    %v788 = vpop.f32.mrb[0].mxu0
    %v789 = vadd.f32 0.0, %v788
    %v790 = vpop.f32.mrb[0].mxu0
    %v791 = vpop.f32.mrb[0].mxu0
    %v792 = vpop.f32.mrb[0].mxu0
    %793 = vdwg.mxu0
    %v794 = vadd.f32 %v709, %v748
    %v795 = vxor.u32 %v794, 2147483648
    %v796 = vmul.f32 %v795, 1.442695
    %v797 = vpow.pop %v796
    %v798 = vadd.f32 %v797, 1.0
    %v799 = vrcp.pop %v798
    %v800 = vmul.f32 1.0, %v799
    %v801 = vadd.f32 %v710, %v750
    %v802 = vxor.u32 %v801, 2147483648
    %v803 = vmul.f32 %v802, 1.442695
    %v804 = vpow.pop %v803
    %v805 = vadd.f32 %v804, 1.0
    %v806 = vrcp.pop %v805
    %v807 = vmul.f32 1.0, %v806
    %v808 = vadd.f32 %v789, %v332
    %v809 = vmul.f32 %v800, %v808
    %v810 = vadd.f32 %v711, %v809
    %v811 = vtanh.pop %v810
    %v812 = vsub.f32 1.0, %v807
    %v813 = vmul.f32 %v812, %v811
    %v814 = vmul.f32 %v807, %v707
    %v815 = vadd.f32 %v813, %v814
    %s816 = scalar_lea.vmem [#allocation2], 72
    %v817 = vld [vmem:[%s816] sm:$0xff]
    %v818 = vld [vmem:[%s816 + $0x8] sm:$0xff]
    %v819 = vld [vmem:[%s816 + $0x10] sm:$0xff]
    %v820 = vpack.c.bf16 %v815, %v815
    %821 = vmatprep.subr.bf16.mxu0 %v450
    %822 = vmatpush1.bf16.msra.mxu0 %v449
    %823 = vmatprep.subr.bf16.mxu0 %v453
    %824 = vmatpush1.bf16.msra.mxu0 %v452
    %825 = vmatprep.subr.bf16.mxu0 %v456
    %826 = vmatpush1.bf16.msra.mxu0 %v455
    %827 = vmatprep.subr.bf16.mxu0 %v459
    %828 = vmatpush1.bf16.msra.mxu0 %v458
    %829 = vmatprep.subr.bf16.mxu0 %v462
    %830 = vmatpush1.bf16.msra.mxu0 %v461
    %831 = vmatprep.subr.bf16.mxu0 %v465
    %832 = vmatpush1.bf16.msra.mxu0 %v464
    %833 = vmatprep.subr.bf16.mxu0 %v468
    %834 = vmatpush1.bf16.msra.mxu0 %v467
    %835 = vmatprep.subr.bf16.mxu0 %v471
    %836 = vmatpush1.bf16.msra.mxu0 %v470
    %837 = vmatprep.subr.bf16.mxu0 0
    %838 = vmatpush1.bf16.msra.mxu0 0
    %839 = vmatprep.subr.bf16.mxu0 0
    %840 = vmatpush1.bf16.msra.mxu0 0
    %841 = vmatprep.subr.bf16.mxu0 0
    %842 = vmatpush1.bf16.msra.mxu0 0
    %843 = vmatprep.subr.bf16.mxu0 0
    %844 = vmatpush1.bf16.msra.mxu0 0
    %845 = vmatprep.subr.bf16.mxu0 0
    %846 = vmatpush1.bf16.msra.mxu0 0
    %847 = vmatprep.subr.bf16.mxu0 0
    %848 = vmatpush1.bf16.msra.mxu0 0
    %849 = vmatprep.subr.bf16.mxu0 0
    %850 = vmatpush1.bf16.msra.mxu0 0
    %851 = vmatprep.subr.bf16.mxu0 0
    %852 = vmatpush1.bf16.msra.mxu0 0
    %853 = vmatprep.mubr.bf16.mxu0 0
    %854 = vmatmul.mubr.bf16.gmra.mrb[0].mxu0 %v820
    %v855 = vpop.f32.mrb[0].mxu0
    %v856 = vadd.f32 0.0, %v855
    %v857 = vpop.f32.mrb[0].mxu0
    %v858 = vadd.f32 0.0, %v857
    %v859 = vpop.f32.mrb[0].mxu0
    %v860 = vpop.f32.mrb[0].mxu0
    %861 = vdwg.mxu0
    %862 = vmatprep.subr.bf16.mxu0 0
    %863 = vmatpush1.bf16.msra.mxu0 %v451
    %864 = vmatprep.subr.bf16.mxu0 0
    %865 = vmatpush1.bf16.msra.mxu0 %v454
    %866 = vmatprep.subr.bf16.mxu0 0
    %867 = vmatpush1.bf16.msra.mxu0 %v457
    %868 = vmatprep.subr.bf16.mxu0 0
    %869 = vmatpush1.bf16.msra.mxu0 %v460
    %870 = vmatprep.subr.bf16.mxu0 0
    %871 = vmatpush1.bf16.msra.mxu0 %v463
    %872 = vmatprep.subr.bf16.mxu0 0
    %873 = vmatpush1.bf16.msra.mxu0 %v466
    %874 = vmatprep.subr.bf16.mxu0 0
    %875 = vmatpush1.bf16.msra.mxu0 %v469
    %876 = vmatprep.subr.bf16.mxu0 0
    %877 = vmatpush1.bf16.msra.mxu0 %v472
    %878 = vmatprep.subr.bf16.mxu0 0
    %879 = vmatpush1.bf16.msra.mxu0 0
    %880 = vmatprep.subr.bf16.mxu0 0
    %881 = vmatpush1.bf16.msra.mxu0 0
    %882 = vmatprep.subr.bf16.mxu0 0
    %883 = vmatpush1.bf16.msra.mxu0 0
    %884 = vmatprep.subr.bf16.mxu0 0
    %885 = vmatpush1.bf16.msra.mxu0 0
    %886 = vmatprep.subr.bf16.mxu0 0
    %887 = vmatpush1.bf16.msra.mxu0 0
    %888 = vmatprep.subr.bf16.mxu0 0
    %889 = vmatpush1.bf16.msra.mxu0 0
    %890 = vmatprep.subr.bf16.mxu0 0
    %891 = vmatpush1.bf16.msra.mxu0 0
    %892 = vmatprep.subr.bf16.mxu0 0
    %893 = vmatpush1.bf16.msra.mxu0 0
    %894 = vmatprep.mubr.bf16.mxu0 0
    %895 = vmatmul.mubr.bf16.gmra.mrb[0].mxu0 %v820
    %v896 = vpop.f32.mrb[0].mxu0
    %v897 = vadd.f32 0.0, %v896
    %v898 = vpop.f32.mrb[0].mxu0
    %v899 = vpop.f32.mrb[0].mxu0
    %v900 = vpop.f32.mrb[0].mxu0
    %901 = vdwg.mxu0
    %v902 = vadd.f32 %v817, %v856
    %v903 = vxor.u32 %v902, 2147483648
    %v904 = vmul.f32 %v903, 1.442695
    %v905 = vpow.pop %v904
    %v906 = vadd.f32 %v905, 1.0
    %v907 = vrcp.pop %v906
    %v908 = vmul.f32 1.0, %v907
    %v909 = vadd.f32 %v818, %v858
    %v910 = vxor.u32 %v909, 2147483648
    %v911 = vmul.f32 %v910, 1.442695
    %v912 = vpow.pop %v911
    %v913 = vadd.f32 %v912, 1.0
    %v914 = vrcp.pop %v913
    %v915 = vmul.f32 1.0, %v914
    %v916 = vadd.f32 %v897, %v332
    %v917 = vmul.f32 %v908, %v916
    %v918 = vadd.f32 %v819, %v917
    %v919 = vtanh.pop %v918
    %v920 = vsub.f32 1.0, %v915
    %v921 = vmul.f32 %v920, %v919
    %v922 = vmul.f32 %v915, %v815
    %v923 = vadd.f32 %v921, %v922
    %s924 = scalar_lea.vmem [#allocation2], 96
    %v925 = vld [vmem:[%s924] sm:$0xff]
    %v926 = vld [vmem:[%s924 + $0x8] sm:$0xff]
    %v927 = vld [vmem:[%s924 + $0x10] sm:$0xff]
    %v928 = vpack.c.bf16 %v923, %v923
    %929 = vmatprep.subr.bf16.mxu0 %v450
    %930 = vmatpush1.bf16.msra.mxu0 %v449
    %931 = vmatprep.subr.bf16.mxu0 %v453
    %932 = vmatpush1.bf16.msra.mxu0 %v452
    %933 = vmatprep.subr.bf16.mxu0 %v456
    %934 = vmatpush1.bf16.msra.mxu0 %v455
    %935 = vmatprep.subr.bf16.mxu0 %v459
    %936 = vmatpush1.bf16.msra.mxu0 %v458
    %937 = vmatprep.subr.bf16.mxu0 %v462
    %938 = vmatpush1.bf16.msra.mxu0 %v461
    %939 = vmatprep.subr.bf16.mxu0 %v465
    %940 = vmatpush1.bf16.msra.mxu0 %v464
    %941 = vmatprep.subr.bf16.mxu0 %v468
    %942 = vmatpush1.bf16.msra.mxu0 %v467
    %943 = vmatprep.subr.bf16.mxu0 %v471
    %944 = vmatpush1.bf16.msra.mxu0 %v470
    %945 = vmatprep.subr.bf16.mxu0 0
    %946 = vmatpush1.bf16.msra.mxu0 0
    %947 = vmatprep.subr.bf16.mxu0 0
    %948 = vmatpush1.bf16.msra.mxu0 0
    %949 = vmatprep.subr.bf16.mxu0 0
    %950 = vmatpush1.bf16.msra.mxu0 0
    %951 = vmatprep.subr.bf16.mxu0 0
    %952 = vmatpush1.bf16.msra.mxu0 0
    %953 = vmatprep.subr.bf16.mxu0 0
    %954 = vmatpush1.bf16.msra.mxu0 0
    %955 = vmatprep.subr.bf16.mxu0 0
    %956 = vmatpush1.bf16.msra.mxu0 0
    %957 = vmatprep.subr.bf16.mxu0 0
    %958 = vmatpush1.bf16.msra.mxu0 0
    %959 = vmatprep.subr.bf16.mxu0 0
    %960 = vmatpush1.bf16.msra.mxu0 0
    %961 = vmatprep.mubr.bf16.mxu0 0
    %962 = vmatmul.mubr.bf16.gmra.mrb[0].mxu0 %v928
    %v963 = vpop.f32.mrb[0].mxu0
    %v964 = vadd.f32 0.0, %v963
    %v965 = vpop.f32.mrb[0].mxu0
    %v966 = vadd.f32 0.0, %v965
    %v967 = vpop.f32.mrb[0].mxu0
    %v968 = vpop.f32.mrb[0].mxu0
    %969 = vdwg.mxu0
    %970 = vmatprep.subr.bf16.mxu0 0
    %971 = vmatpush1.bf16.msra.mxu0 %v451
    %972 = vmatprep.subr.bf16.mxu0 0
    %973 = vmatpush1.bf16.msra.mxu0 %v454
    %974 = vmatprep.subr.bf16.mxu0 0
    %975 = vmatpush1.bf16.msra.mxu0 %v457
    %976 = vmatprep.subr.bf16.mxu0 0
    %977 = vmatpush1.bf16.msra.mxu0 %v460
    %978 = vmatprep.subr.bf16.mxu0 0
    %979 = vmatpush1.bf16.msra.mxu0 %v463
    %980 = vmatprep.subr.bf16.mxu0 0
    %981 = vmatpush1.bf16.msra.mxu0 %v466
    %982 = vmatprep.subr.bf16.mxu0 0
    %983 = vmatpush1.bf16.msra.mxu0 %v469
    %984 = vmatprep.subr.bf16.mxu0 0
    %985 = vmatpush1.bf16.msra.mxu0 %v472
    %986 = vmatprep.subr.bf16.mxu0 0
    %987 = vmatpush1.bf16.msra.mxu0 0
    %988 = vmatprep.subr.bf16.mxu0 0
    %989 = vmatpush1.bf16.msra.mxu0 0
    %990 = vmatprep.subr.bf16.mxu0 0
    %991 = vmatpush1.bf16.msra.mxu0 0
    %992 = vmatprep.subr.bf16.mxu0 0
    %993 = vmatpush1.bf16.msra.mxu0 0
    %994 = vmatprep.subr.bf16.mxu0 0
    %995 = vmatpush1.bf16.msra.mxu0 0
    %996 = vmatprep.subr.bf16.mxu0 0
    %997 = vmatpush1.bf16.msra.mxu0 0
    %998 = vmatprep.subr.bf16.mxu0 0
    %999 = vmatpush1.bf16.msra.mxu0 0
    %1000 = vmatprep.subr.bf16.mxu0 0
    %1001 = vmatpush1.bf16.msra.mxu0 0
    %1002 = vmatprep.mubr.bf16.mxu0 0
    %1003 = vmatmul.mubr.bf16.gmra.mrb[0].mxu0 %v928
    %v1004 = vpop.f32.mrb[0].mxu0
    %v1005 = vadd.f32 0.0, %v1004
    %v1006 = vpop.f32.mrb[0].mxu0
    %v1007 = vpop.f32.mrb[0].mxu0
    %v1008 = vpop.f32.mrb[0].mxu0
    %1009 = vdwg.mxu0
    %v1010 = vadd.f32 %v925, %v964
    %v1011 = vxor.u32 %v1010, 2147483648
    %v1012 = vmul.f32 %v1011, 1.442695
    %v1013 = vpow.pop %v1012
    %v1014 = vadd.f32 %v1013, 1.0
    %v1015 = vrcp.pop %v1014
    %v1016 = vmul.f32 1.0, %v1015
    %v1017 = vadd.f32 %v926, %v966
    %v1018 = vxor.u32 %v1017, 2147483648
    %v1019 = vmul.f32 %v1018, 1.442695
    %v1020 = vpow.pop %v1019
    %v1021 = vadd.f32 %v1020, 1.0
    %v1022 = vrcp.pop %v1021
    %v1023 = vmul.f32 1.0, %v1022
    %v1024 = vadd.f32 %v1005, %v332
    %v1025 = vmul.f32 %v1016, %v1024
    %v1026 = vadd.f32 %v927, %v1025
    %v1027 = vtanh.pop %v1026
    %v1028 = vsub.f32 1.0, %v1023
    %v1029 = vmul.f32 %v1028, %v1027
    %v1030 = vmul.f32 %v1023, %v923
    %v1031 = vadd.f32 %v1029, %v1030
    %s1032 = scalar_lea.vmem [#allocation2], 120
    %v1033 = vld [vmem:[%s1032] sm:$0xff]
    %v1034 = vld [vmem:[%s1032 + $0x8] sm:$0xff]
    %v1035 = vld [vmem:[%s1032 + $0x10] sm:$0xff]
    %v1036 = vpack.c.bf16 %v1031, %v1031
    %1037 = vmatprep.subr.bf16.mxu0 %v450
    %1038 = vmatpush1.bf16.msra.mxu0 %v449
    %1039 = vmatprep.subr.bf16.mxu0 %v453
    %1040 = vmatpush1.bf16.msra.mxu0 %v452
    %1041 = vmatprep.subr.bf16.mxu0 %v456
    %1042 = vmatpush1.bf16.msra.mxu0 %v455
    %1043 = vmatprep.subr.bf16.mxu0 %v459
    %1044 = vmatpush1.bf16.msra.mxu0 %v458
    %1045 = vmatprep.subr.bf16.mxu0 %v462
    %1046 = vmatpush1.bf16.msra.mxu0 %v461
    %1047 = vmatprep.subr.bf16.mxu0 %v465
    %1048 = vmatpush1.bf16.msra.mxu0 %v464
    %1049 = vmatprep.subr.bf16.mxu0 %v468
    %1050 = vmatpush1.bf16.msra.mxu0 %v467
    %1051 = vmatprep.subr.bf16.mxu0 %v471
    %1052 = vmatpush1.bf16.msra.mxu0 %v470
    %1053 = vmatprep.subr.bf16.mxu0 0
    %1054 = vmatpush1.bf16.msra.mxu0 0
    %1055 = vmatprep.subr.bf16.mxu0 0
    %1056 = vmatpush1.bf16.msra.mxu0 0
    %1057 = vmatprep.subr.bf16.mxu0 0
    %1058 = vmatpush1.bf16.msra.mxu0 0
    %1059 = vmatprep.subr.bf16.mxu0 0
    %1060 = vmatpush1.bf16.msra.mxu0 0
    %1061 = vmatprep.subr.bf16.mxu0 0
    %1062 = vmatpush1.bf16.msra.mxu0 0
    %1063 = vmatprep.subr.bf16.mxu0 0
    %1064 = vmatpush1.bf16.msra.mxu0 0
    %1065 = vmatprep.subr.bf16.mxu0 0
    %1066 = vmatpush1.bf16.msra.mxu0 0
    %1067 = vmatprep.subr.bf16.mxu0 0
    %1068 = vmatpush1.bf16.msra.mxu0 0
    %1069 = vmatprep.mubr.bf16.mxu0 0
    %1070 = vmatmul.mubr.bf16.gmra.mrb[0].mxu0 %v1036
    %v1071 = vpop.f32.mrb[0].mxu0
    %v1072 = vadd.f32 0.0, %v1071
    %v1073 = vpop.f32.mrb[0].mxu0
    %v1074 = vadd.f32 0.0, %v1073
    %v1075 = vpop.f32.mrb[0].mxu0
    %v1076 = vpop.f32.mrb[0].mxu0
    %1077 = vdwg.mxu0
    %1078 = vmatprep.subr.bf16.mxu0 0
    %1079 = vmatpush1.bf16.msra.mxu0 %v451
    %1080 = vmatprep.subr.bf16.mxu0 0
    %1081 = vmatpush1.bf16.msra.mxu0 %v454
    %1082 = vmatprep.subr.bf16.mxu0 0
    %1083 = vmatpush1.bf16.msra.mxu0 %v457
    %1084 = vmatprep.subr.bf16.mxu0 0
    %1085 = vmatpush1.bf16.msra.mxu0 %v460
    %1086 = vmatprep.subr.bf16.mxu0 0
    %1087 = vmatpush1.bf16.msra.mxu0 %v463
    %1088 = vmatprep.subr.bf16.mxu0 0
    %1089 = vmatpush1.bf16.msra.mxu0 %v466
    %1090 = vmatprep.subr.bf16.mxu0 0
    %1091 = vmatpush1.bf16.msra.mxu0 %v469
    %1092 = vmatprep.subr.bf16.mxu0 0
    %1093 = vmatpush1.bf16.msra.mxu0 %v472
    %1094 = vmatprep.subr.bf16.mxu0 0
    %1095 = vmatpush1.bf16.msra.mxu0 0
    %1096 = vmatprep.subr.bf16.mxu0 0
    %1097 = vmatpush1.bf16.msra.mxu0 0
    %1098 = vmatprep.subr.bf16.mxu0 0
    %1099 = vmatpush1.bf16.msra.mxu0 0
    %1100 = vmatprep.subr.bf16.mxu0 0
    %1101 = vmatpush1.bf16.msra.mxu0 0
    %1102 = vmatprep.subr.bf16.mxu0 0
    %1103 = vmatpush1.bf16.msra.mxu0 0
    %1104 = vmatprep.subr.bf16.mxu0 0
    %1105 = vmatpush1.bf16.msra.mxu0 0
    %1106 = vmatprep.subr.bf16.mxu0 0
    %1107 = vmatpush1.bf16.msra.mxu0 0
    %1108 = vmatprep.subr.bf16.mxu0 0
    %1109 = vmatpush1.bf16.msra.mxu0 0
    %1110 = vmatprep.mubr.bf16.mxu0 0
    %1111 = vmatmul.mubr.bf16.gmra.mrb[0].mxu0 %v1036
    %v1112 = vpop.f32.mrb[0].mxu0
    %v1113 = vadd.f32 0.0, %v1112
    %v1114 = vpop.f32.mrb[0].mxu0
    %v1115 = vpop.f32.mrb[0].mxu0
    %v1116 = vpop.f32.mrb[0].mxu0
    %1117 = vdwg.mxu0
    %v1118 = vadd.f32 %v1033, %v1072
    %v1119 = vxor.u32 %v1118, 2147483648
    %v1120 = vmul.f32 %v1119, 1.442695
    %v1121 = vpow.pop %v1120
    %v1122 = vadd.f32 %v1121, 1.0
    %v1123 = vrcp.pop %v1122
    %v1124 = vmul.f32 1.0, %v1123
    %v1125 = vadd.f32 %v1034, %v1074
    %v1126 = vxor.u32 %v1125, 2147483648
    %v1127 = vmul.f32 %v1126, 1.442695
    %v1128 = vpow.pop %v1127
    %v1129 = vadd.f32 %v1128, 1.0
    %v1130 = vrcp.pop %v1129
    %v1131 = vmul.f32 1.0, %v1130
    %v1132 = vadd.f32 %v1113, %v332
    %v1133 = vmul.f32 %v1124, %v1132
    %v1134 = vadd.f32 %v1035, %v1133
    %v1135 = vtanh.pop %v1134
    %v1136 = vsub.f32 1.0, %v1131
    %v1137 = vmul.f32 %v1136, %v1135
    %v1138 = vmul.f32 %v1131, %v1031
    %v1139 = vadd.f32 %v1137, %v1138
    %s1140 = scalar_lea.vmem [#allocation2], 144
    %v1141 = vld [vmem:[%s1140] sm:$0xff]
    %v1142 = vld [vmem:[%s1140 + $0x8] sm:$0xff]
    %v1143 = vld [vmem:[%s1140 + $0x10] sm:$0xff]
    %v1144 = vpack.c.bf16 %v1139, %v1139
    %1145 = vmatprep.subr.bf16.mxu0 %v450
    %1146 = vmatpush1.bf16.msra.mxu0 %v449
    %1147 = vmatprep.subr.bf16.mxu0 %v453
    %1148 = vmatpush1.bf16.msra.mxu0 %v452
    %1149 = vmatprep.subr.bf16.mxu0 %v456
    %1150 = vmatpush1.bf16.msra.mxu0 %v455
    %1151 = vmatprep.subr.bf16.mxu0 %v459
    %1152 = vmatpush1.bf16.msra.mxu0 %v458
    %1153 = vmatprep.subr.bf16.mxu0 %v462
    %1154 = vmatpush1.bf16.msra.mxu0 %v461
    %1155 = vmatprep.subr.bf16.mxu0 %v465
    %1156 = vmatpush1.bf16.msra.mxu0 %v464
    %1157 = vmatprep.subr.bf16.mxu0 %v468
    %1158 = vmatpush1.bf16.msra.mxu0 %v467
    %1159 = vmatprep.subr.bf16.mxu0 %v471
    %1160 = vmatpush1.bf16.msra.mxu0 %v470
    %1161 = vmatprep.subr.bf16.mxu0 0
    %1162 = vmatpush1.bf16.msra.mxu0 0
    %1163 = vmatprep.subr.bf16.mxu0 0
    %1164 = vmatpush1.bf16.msra.mxu0 0
    %1165 = vmatprep.subr.bf16.mxu0 0
    %1166 = vmatpush1.bf16.msra.mxu0 0
    %1167 = vmatprep.subr.bf16.mxu0 0
    %1168 = vmatpush1.bf16.msra.mxu0 0
    %1169 = vmatprep.subr.bf16.mxu0 0
    %1170 = vmatpush1.bf16.msra.mxu0 0
    %1171 = vmatprep.subr.bf16.mxu0 0
    %1172 = vmatpush1.bf16.msra.mxu0 0
    %1173 = vmatprep.subr.bf16.mxu0 0
    %1174 = vmatpush1.bf16.msra.mxu0 0
    %1175 = vmatprep.subr.bf16.mxu0 0
    %1176 = vmatpush1.bf16.msra.mxu0 0
    %1177 = vmatprep.mubr.bf16.mxu0 0
    %1178 = vmatmul.mubr.bf16.gmra.mrb[0].mxu0 %v1144
    %v1179 = vpop.f32.mrb[0].mxu0
    %v1180 = vadd.f32 0.0, %v1179
    %v1181 = vpop.f32.mrb[0].mxu0
    %v1182 = vadd.f32 0.0, %v1181
    %v1183 = vpop.f32.mrb[0].mxu0
    %v1184 = vpop.f32.mrb[0].mxu0
    %1185 = vdwg.mxu0
    %1186 = vmatprep.subr.bf16.mxu0 0
    %1187 = vmatpush1.bf16.msra.mxu0 %v451
    %1188 = vmatprep.subr.bf16.mxu0 0
    %1189 = vmatpush1.bf16.msra.mxu0 %v454
    %1190 = vmatprep.subr.bf16.mxu0 0
    %1191 = vmatpush1.bf16.msra.mxu0 %v457
    %1192 = vmatprep.subr.bf16.mxu0 0
    %1193 = vmatpush1.bf16.msra.mxu0 %v460
    %1194 = vmatprep.subr.bf16.mxu0 0
    %1195 = vmatpush1.bf16.msra.mxu0 %v463
    %1196 = vmatprep.subr.bf16.mxu0 0
    %1197 = vmatpush1.bf16.msra.mxu0 %v466
    %1198 = vmatprep.subr.bf16.mxu0 0
    %1199 = vmatpush1.bf16.msra.mxu0 %v469
    %1200 = vmatprep.subr.bf16.mxu0 0
    %1201 = vmatpush1.bf16.msra.mxu0 %v472
    %1202 = vmatprep.subr.bf16.mxu0 0
    %1203 = vmatpush1.bf16.msra.mxu0 0
    %1204 = vmatprep.subr.bf16.mxu0 0
    %1205 = vmatpush1.bf16.msra.mxu0 0
    %1206 = vmatprep.subr.bf16.mxu0 0
    %1207 = vmatpush1.bf16.msra.mxu0 0
    %1208 = vmatprep.subr.bf16.mxu0 0
    %1209 = vmatpush1.bf16.msra.mxu0 0
    %1210 = vmatprep.subr.bf16.mxu0 0
    %1211 = vmatpush1.bf16.msra.mxu0 0
    %1212 = vmatprep.subr.bf16.mxu0 0
    %1213 = vmatpush1.bf16.msra.mxu0 0
    %1214 = vmatprep.subr.bf16.mxu0 0
    %1215 = vmatpush1.bf16.msra.mxu0 0
    %1216 = vmatprep.subr.bf16.mxu0 0
    %1217 = vmatpush1.bf16.msra.mxu0 0
    %1218 = vmatprep.mubr.bf16.mxu0 0
    %1219 = vmatmul.mubr.bf16.gmra.mrb[0].mxu0 %v1144
    %v1220 = vpop.f32.mrb[0].mxu0
    %v1221 = vadd.f32 0.0, %v1220
    %v1222 = vpop.f32.mrb[0].mxu0
    %v1223 = vpop.f32.mrb[0].mxu0
    %v1224 = vpop.f32.mrb[0].mxu0
    %1225 = vdwg.mxu0
    %v1226 = vadd.f32 %v1141, %v1180
    %v1227 = vxor.u32 %v1226, 2147483648
    %v1228 = vmul.f32 %v1227, 1.442695
    %v1229 = vpow.pop %v1228
    %v1230 = vadd.f32 %v1229, 1.0
    %v1231 = vrcp.pop %v1230
    %v1232 = vmul.f32 1.0, %v1231
    %v1233 = vadd.f32 %v1142, %v1182
    %v1234 = vxor.u32 %v1233, 2147483648
    %v1235 = vmul.f32 %v1234, 1.442695
    %v1236 = vpow.pop %v1235
    %v1237 = vadd.f32 %v1236, 1.0
    %v1238 = vrcp.pop %v1237
    %v1239 = vmul.f32 1.0, %v1238
    %v1240 = vadd.f32 %v1221, %v332
    %v1241 = vmul.f32 %v1232, %v1240
    %v1242 = vadd.f32 %v1143, %v1241
    %v1243 = vtanh.pop %v1242
    %v1244 = vsub.f32 1.0, %v1239
    %v1245 = vmul.f32 %v1244, %v1243
    %v1246 = vmul.f32 %v1239, %v1139
    %v1247 = vadd.f32 %v1245, %v1246
    %s1248 = scalar_lea.vmem [#allocation2], 168
    %v1249 = vld [vmem:[%s1248] sm:$0xff]
    %v1250 = vld [vmem:[%s1248 + $0x8] sm:$0xff]
    %v1251 = vld [vmem:[%s1248 + $0x10] sm:$0xff]
    %v1252 = vpack.c.bf16 %v1247, %v1247
    %1253 = vmatprep.subr.bf16.mxu0 %v450
    %1254 = vmatpush1.bf16.msra.mxu0 %v449
    %1255 = vmatprep.subr.bf16.mxu0 %v453
    %1256 = vmatpush1.bf16.msra.mxu0 %v452
    %1257 = vmatprep.subr.bf16.mxu0 %v456
    %1258 = vmatpush1.bf16.msra.mxu0 %v455
    %1259 = vmatprep.subr.bf16.mxu0 %v459
    %1260 = vmatpush1.bf16.msra.mxu0 %v458
    %1261 = vmatprep.subr.bf16.mxu0 %v462
    %1262 = vmatpush1.bf16.msra.mxu0 %v461
    %1263 = vmatprep.subr.bf16.mxu0 %v465
    %1264 = vmatpush1.bf16.msra.mxu0 %v464
    %1265 = vmatprep.subr.bf16.mxu0 %v468
    %1266 = vmatpush1.bf16.msra.mxu0 %v467
    %1267 = vmatprep.subr.bf16.mxu0 %v471
    %1268 = vmatpush1.bf16.msra.mxu0 %v470
    %1269 = vmatprep.subr.bf16.mxu0 0
    %1270 = vmatpush1.bf16.msra.mxu0 0
    %1271 = vmatprep.subr.bf16.mxu0 0
    %1272 = vmatpush1.bf16.msra.mxu0 0
    %1273 = vmatprep.subr.bf16.mxu0 0
    %1274 = vmatpush1.bf16.msra.mxu0 0
    %1275 = vmatprep.subr.bf16.mxu0 0
    %1276 = vmatpush1.bf16.msra.mxu0 0
    %1277 = vmatprep.subr.bf16.mxu0 0
    %1278 = vmatpush1.bf16.msra.mxu0 0
    %1279 = vmatprep.subr.bf16.mxu0 0
    %1280 = vmatpush1.bf16.msra.mxu0 0
    %1281 = vmatprep.subr.bf16.mxu0 0
    %1282 = vmatpush1.bf16.msra.mxu0 0
    %1283 = vmatprep.subr.bf16.mxu0 0
    %1284 = vmatpush1.bf16.msra.mxu0 0
    %1285 = vmatprep.mubr.bf16.mxu0 0
    %1286 = vmatmul.mubr.bf16.gmra.mrb[0].mxu0 %v1252
    %v1287 = vpop.f32.mrb[0].mxu0
    %v1288 = vadd.f32 0.0, %v1287
    %v1289 = vpop.f32.mrb[0].mxu0
    %v1290 = vadd.f32 0.0, %v1289
    %v1291 = vpop.f32.mrb[0].mxu0
    %v1292 = vpop.f32.mrb[0].mxu0
    %1293 = vdwg.mxu0
    %1294 = vmatprep.subr.bf16.mxu0 0
    %1295 = vmatpush1.bf16.msra.mxu0 %v451
    %1296 = vmatprep.subr.bf16.mxu0 0
    %1297 = vmatpush1.bf16.msra.mxu0 %v454
    %1298 = vmatprep.subr.bf16.mxu0 0
    %1299 = vmatpush1.bf16.msra.mxu0 %v457
    %1300 = vmatprep.subr.bf16.mxu0 0
    %1301 = vmatpush1.bf16.msra.mxu0 %v460
    %1302 = vmatprep.subr.bf16.mxu0 0
    %1303 = vmatpush1.bf16.msra.mxu0 %v463
    %1304 = vmatprep.subr.bf16.mxu0 0
    %1305 = vmatpush1.bf16.msra.mxu0 %v466
    %1306 = vmatprep.subr.bf16.mxu0 0
    %1307 = vmatpush1.bf16.msra.mxu0 %v469
    %1308 = vmatprep.subr.bf16.mxu0 0
    %1309 = vmatpush1.bf16.msra.mxu0 %v472
    %1310 = vmatprep.subr.bf16.mxu0 0
    %1311 = vmatpush1.bf16.msra.mxu0 0
    %1312 = vmatprep.subr.bf16.mxu0 0
    %1313 = vmatpush1.bf16.msra.mxu0 0
    %1314 = vmatprep.subr.bf16.mxu0 0
    %1315 = vmatpush1.bf16.msra.mxu0 0
    %1316 = vmatprep.subr.bf16.mxu0 0
    %1317 = vmatpush1.bf16.msra.mxu0 0
    %1318 = vmatprep.subr.bf16.mxu0 0
    %1319 = vmatpush1.bf16.msra.mxu0 0
    %1320 = vmatprep.subr.bf16.mxu0 0
    %1321 = vmatpush1.bf16.msra.mxu0 0
    %1322 = vmatprep.subr.bf16.mxu0 0
    %1323 = vmatpush1.bf16.msra.mxu0 0
    %1324 = vmatprep.subr.bf16.mxu0 0
    %1325 = vmatpush1.bf16.msra.mxu0 0
    %1326 = vmatprep.mubr.bf16.mxu0 0
    %1327 = vmatmul.mubr.bf16.gmra.mrb[0].mxu0 %v1252
    %v1328 = vpop.f32.mrb[0].mxu0
    %v1329 = vadd.f32 0.0, %v1328
    %v1330 = vpop.f32.mrb[0].mxu0
    %v1331 = vpop.f32.mrb[0].mxu0
    %v1332 = vpop.f32.mrb[0].mxu0
    %1333 = vdwg.mxu0
    %v1334 = vadd.f32 %v1249, %v1288
    %v1335 = vxor.u32 %v1334, 2147483648
    %v1336 = vmul.f32 %v1335, 1.442695
    %v1337 = vpow.pop %v1336
    %v1338 = vadd.f32 %v1337, 1.0
    %v1339 = vrcp.pop %v1338
    %v1340 = vmul.f32 1.0, %v1339
    %v1341 = vadd.f32 %v1250, %v1290
    %v1342 = vxor.u32 %v1341, 2147483648
    %v1343 = vmul.f32 %v1342, 1.442695
    %v1344 = vpow.pop %v1343
    %v1345 = vadd.f32 %v1344, 1.0
    %v1346 = vrcp.pop %v1345
    %v1347 = vmul.f32 1.0, %v1346
    %v1348 = vadd.f32 %v1329, %v332
    %v1349 = vmul.f32 %v1340, %v1348
    %v1350 = vadd.f32 %v1251, %v1349
    %v1351 = vtanh.pop %v1350
    %v1352 = vsub.f32 1.0, %v1347
    %v1353 = vmul.f32 %v1352, %v1351
    %v1354 = vmul.f32 %v1347, %v1247
    %v1355 = vadd.f32 %v1353, %v1354
    %v1356 = vpack.c.bf16 %v1355, %v1355
    %v1357 = vld [vmem:[%s5] sm:$0xf]
    %v1358 = vld [vmem:[%s5 + $0x4] sm:$0xf]
    %v1359 = vld [vmem:[%s5 + $0x8] sm:$0xf]
    %v1360 = vld [vmem:[%s5 + $0xc] sm:$0xf]
    %v1361 = vld [vmem:[%s5 + $0x10] sm:$0xf]
    %v1362 = vld [vmem:[%s5 + $0x14] sm:$0xf]
    %v1363 = vld [vmem:[%s5 + $0x18] sm:$0xf]
    %v1364 = vld [vmem:[%s5 + $0x1c] sm:$0xf]
    %v1365 = vld [vmem:[%s5 + $0x20] sm:$0xf]
    %v1366 = vld [vmem:[%s5 + $0x24] sm:$0xf]
    %v1367 = vld [vmem:[%s5 + $0x28] sm:$0xf]
    %v1368 = vld [vmem:[%s5 + $0x2c] sm:$0xf]
    %v1369 = vld [vmem:[%s5 + $0x30] sm:$0xf]
    %v1370 = vld [vmem:[%s5 + $0x34] sm:$0xf]
    %v1371 = vld [vmem:[%s5 + $0x38] sm:$0xf]
    %v1372 = vld [vmem:[%s5 + $0x3c] sm:$0xf]
    %v1373 = vld [vmem:[%s6] sm:$0x1]
    %v1375 = vlaneseq
    %v1376 = vshrl.u32 %v1375, 7
    %v1377 = vsub.s32 0, %v1376
    %v1378 = vrot.slane %v1373, %v1377
    %v1396 = vunpack.c.l.b16 %v1357
    %v1397 = vunpack.c.l.b16 %v1358
    %v1398 = vunpack.c.l.b16 %v1359
    %v1399 = vunpack.c.l.b16 %v1360
    %v1400 = vunpack.c.l.b16 %v1361
    %v1401 = vunpack.c.l.b16 %v1362
    %v1402 = vunpack.c.l.b16 %v1363
    %v1403 = vunpack.c.l.b16 %v1364
    %v1404 = vunpack.c.l.b16 %v1365
    %v1405 = vunpack.c.l.b16 %v1366
    %v1406 = vunpack.c.l.b16 %v1367
    %v1407 = vunpack.c.l.b16 %v1368
    %v1408 = vunpack.c.l.b16 %v1369
    %v1409 = vunpack.c.l.b16 %v1370
    %v1410 = vunpack.c.l.b16 %v1371
    %v1411 = vunpack.c.l.b16 %v1372
    %v1412 = vpack.c.b16 %v1397, %v1396
    %v1413 = vpack.c.b16 %v1399, %v1398
    %v1414 = vpack.c.b16 %v1401, %v1400
    %v1415 = vpack.c.b16 %v1403, %v1402
    %v1416 = vpack.c.b16 %v1405, %v1404
    %v1417 = vpack.c.b16 %v1407, %v1406
    %v1418 = vpack.c.b16 %v1409, %v1408
    %v1419 = vpack.c.b16 %v1411, %v1410
    %1428 = vmatprep.subr.bf16.mxu0 0
    %1429 = vmatpush1.bf16.msra.mxu0 %v1412
    %1430 = vmatprep.subr.bf16.mxu0 0
    %1431 = vmatpush1.bf16.msra.mxu0 %v1413
    %1432 = vmatprep.subr.bf16.mxu0 0
    %1433 = vmatpush1.bf16.msra.mxu0 %v1414
    %1434 = vmatprep.subr.bf16.mxu0 0
    %1435 = vmatpush1.bf16.msra.mxu0 %v1415
    %1436 = vmatprep.subr.bf16.mxu0 0
    %1437 = vmatpush1.bf16.msra.mxu0 %v1416
    %1438 = vmatprep.subr.bf16.mxu0 0
    %1439 = vmatpush1.bf16.msra.mxu0 %v1417
    %1440 = vmatprep.subr.bf16.mxu0 0
    %1441 = vmatpush1.bf16.msra.mxu0 %v1418
    %1442 = vmatprep.subr.bf16.mxu0 0
    %1443 = vmatpush1.bf16.msra.mxu0 %v1419
    %1444 = vmatprep.subr.bf16.mxu0 0
    %1445 = vmatpush1.bf16.msra.mxu0 0
    %1446 = vmatprep.subr.bf16.mxu0 0
    %1447 = vmatpush1.bf16.msra.mxu0 0
    %1448 = vmatprep.subr.bf16.mxu0 0
    %1449 = vmatpush1.bf16.msra.mxu0 0
    %1450 = vmatprep.subr.bf16.mxu0 0
    %1451 = vmatpush1.bf16.msra.mxu0 0
    %1452 = vmatprep.subr.bf16.mxu0 0
    %1453 = vmatpush1.bf16.msra.mxu0 0
    %1454 = vmatprep.subr.bf16.mxu0 0
    %1455 = vmatpush1.bf16.msra.mxu0 0
    %1456 = vmatprep.subr.bf16.mxu0 0
    %1457 = vmatpush1.bf16.msra.mxu0 0
    %1458 = vmatprep.subr.bf16.mxu0 0
    %1459 = vmatpush1.bf16.msra.mxu0 0
    %1460 = vmatprep.mubr.bf16.mxu0 0
    %1461 = vmatmul.mubr.bf16.gmra.mrb[0].mxu0 %v1356
    %v1462 = vpop.f32.mrb[0].mxu0
    %v1463 = vadd.f32 %v1378, %v1462
    %v1464 = vpop.f32.mrb[0].mxu0
    %v1465 = vpop.f32.mrb[0].mxu0
    %v1466 = vpop.f32.mrb[0].mxu0
    %1467 = vdwg.mxu0
    %v1468 = vlaneseq
    %v1469 = vand.u32 %v1468, 127
    %vm1470 = vcmp.lt.s32.totalorder %v1469, 16
    %v1471 = vand.u32 2147483647, %v1463
    %v1472 = vsub.f32 0.0, %v1471
    %v1473 = vsel %vm1470, %v1463, %v1472
    %1474 = vst [vmem:[#allocation9] sm:$0xff] %v1473
    // Predicated region
    $region42: #{tpu_custom_call.1} parent=1 // pred_check
      _
    $region43: #{tpu_custom_call.1} parent=1 // pred_check_branch
      %1476 = sbr.rel (0) target = $region45
    $region44: #{tpu_custom_call.1} parent=1 // pred_region
      %s1478 = ssub.s32 128, 128
      %1479 = vsyncadd [#allocation5], %s1478
      %s1481 = sshll.u32 [#allocation9], 4
      %s1482 = int_to_ptr.vmem [resolvable:$true] %s1481
      %1484 = dma.vmem_to_hbm [thread:$0]  %s1482, 128, %s7, [#allocation5]
    $region45: #{tpu_custom_call.1} parent=1 // pred_fallthru
      _
    // Predicated region
    $region46: #{tpu_custom_call.1} parent=1 // pred_check
      _
    $region47: #{tpu_custom_call.1} parent=1 // pred_check_branch
      %1486 = sbr.rel (0) target = $region49
    $region48: #{tpu_custom_call.1} parent=1 // pred_region
      %1487 = dma.done [#allocation5], 128
    $region49: #{tpu_custom_call.1} parent=1 // pred_fallthru
      _
    %1488 = vsyncpa [#allocation4], 1
    %1489 = vsyncpa [#allocation7], 1
    %1490 = vsyncpa [#allocation5], 1

</llo_original>
